<compile_context>
chip_gen: v6e
topology: v6e:2x2x1
jax: 0.10.0
libtpu: 0.0.40
codegen_flags: <defaults>
</compile_context>

<pallas_src>
import functools

import jax
import jax.numpy as jnp
from jax.experimental import pallas as pl
from jax.experimental.pallas import tpu as pltpu


def _round_up(x, m):
    return ((x + m - 1) // m) * m


def _cdiv(a, b):
    return (a + b - 1) // b


# ----------------------------------------------------------------------------
# Packed-weight slab layout (static, per branch).
# ----------------------------------------------------------------------------
def _weight_layout(si, vi, H, so, vo):
    lane_w = _round_up(max(si, H, so, vo), 128)
    rows = {"gamma": 0, "beta": 1, "bs": 2, "bg": 3}  # 1-row params share group 0
    off = 8
    for name, nrows in (("wdown", vi), ("ws_s", si), ("ws_v", H),
                        ("wup", H), ("wg", so)):
        rows[name] = off
        off += _round_up(nrows, 8)        # keep every slice 8-sublane aligned
    return lane_w, rows, off


# ----------------------------------------------------------------------------
# Pallas kernel factory: GCPLayerNorm (pre_norm) + GCP embedding for one tile.
# ----------------------------------------------------------------------------
def _make_kernel(si, vi, H, so, vo, rows, out_w):
    eps_ln = 1e-5
    eps_v = 1e-8
    out_used = so + 3 * vo

    def kernel(x_ref, w_ref, out_ref):
        x = x_ref[...].astype(jnp.float32)          # [TB, si + 3*vi]
        tb = x.shape[0]
        s = x[:, :si]                               # [TB, si]
        vx = x[:, si:si + vi]                       # [TB, vi]
        vy = x[:, si + vi:si + 2 * vi]
        vz = x[:, si + 2 * vi:si + 3 * vi]

        # ---- unpack weight slab (static, 8-aligned row slices) -------------
        gamma = w_ref[rows["gamma"]:rows["gamma"] + 1, :si]
        beta = w_ref[rows["beta"]:rows["beta"] + 1, :si]
        bs = w_ref[rows["bs"]:rows["bs"] + 1, :so]
        bg = w_ref[rows["bg"]:rows["bg"] + 1, :vo]
        wdown = w_ref[rows["wdown"]:rows["wdown"] + vi, :H]
        ws_s = w_ref[rows["ws_s"]:rows["ws_s"] + si, :so]
        ws_v = w_ref[rows["ws_v"]:rows["ws_v"] + H, :so]
        wup = w_ref[rows["wup"]:rows["wup"] + H, :vo]
        wg = w_ref[rows["wg"]:rows["wg"] + so, :vo]

        # ---- GCPLayerNorm (pre_norm=True) -----------------------------------
        mu = jnp.mean(s, axis=-1, keepdims=True)
        var = jnp.mean(jnp.square(s - mu), axis=-1, keepdims=True)
        s = (s - mu) * jax.lax.rsqrt(var + eps_ln) * gamma + beta

        chan_sq = jnp.maximum(vx * vx + vy * vy + vz * vz, eps_v)     # [TB, vi]
        inv_vn = jax.lax.rsqrt(jnp.mean(chan_sq, axis=-1, keepdims=True))
        vx = vx * inv_vn
        vy = vy * inv_vn
        vz = vz * inv_vn

        # ---- GCP (frame updates ablated; nonlinearities = (None, None)) -----
        vhx = jnp.dot(vx, wdown, preferred_element_type=jnp.float32)  # [TB, H]
        vhy = jnp.dot(vy, wdown, preferred_element_type=jnp.float32)
        vhz = jnp.dot(vz, wdown, preferred_element_type=jnp.float32)
        # clamp squared norm before sqrt (matches GVP-style safe norm)
        vh_norm = jnp.sqrt(jnp.maximum(vhx * vhx + vhy * vhy + vhz * vhz, eps_v))

        # concat(s, vh_norm) @ W_s  ==  s @ W_s[:si] + vh_norm @ W_s[si:]
        s_out = (jnp.dot(s, ws_s, preferred_element_type=jnp.float32)
                 + jnp.dot(vh_norm, ws_v, preferred_element_type=jnp.float32)
                 + bs)                                                 # [TB, so]

        gate = jax.nn.sigmoid(
            jnp.dot(s_out, wg, preferred_element_type=jnp.float32) + bg)  # [TB, vo]

        vux = jnp.dot(vhx, wup, preferred_element_type=jnp.float32) * gate
        vuy = jnp.dot(vhy, wup, preferred_element_type=jnp.float32) * gate
        vuz = jnp.dot(vhz, wup, preferred_element_type=jnp.float32) * gate

        # ---- direct lane-slice stores into the lane-dense output block ------
        dt = out_ref.dtype
        out_ref[:, :so] = s_out.astype(dt)
        out_ref[:, so:so + vo] = vux.astype(dt)
        out_ref[:, so + vo:so + 2 * vo] = vuy.astype(dt)
        out_ref[:, so + 2 * vo:so + 3 * vo] = vuz.astype(dt)
        if out_w > out_used:  # deterministic pad lanes (sliced off by wrapper)
            out_ref[:, out_used:] = jnp.zeros((tb, out_w - out_used), dt)

    return kernel


# ----------------------------------------------------------------------------
# Wrapper: one pallas_call per ScalarVector stream (nodes / edges).
# ----------------------------------------------------------------------------
def _gcp_embed(s, v, p, max_tile_rows=1024):
    """s: [B, si]; v: [B, vi, 3] (PyTorch convention). Returns ([B, so], [B, vo, 3])."""
    B, si = s.shape
    vi = v.shape[1]
    H = p["wdown"].shape[1]
    so = p["ws_s"].shape[1]
    vo = p["wup"].shape[1]

    # One lane-packed input slab per row: [ s | v_x | v_y | v_z ].
    v = v.astype(s.dtype)
    x = jnp.concatenate([s, v[:, :, 0], v[:, :, 1], v[:, :, 2]], axis=-1)
    in_w = si + 3 * vi

    # Row tiling: multiple of 8 sublanes, >= 2 grid steps (both v7x cores),
    # capped at max_tile_rows.
    padded8 = _round_up(B, 8)
    tile_rows = min(max_tile_rows, max(8, _round_up(_cdiv(padded8, 2), 8)))
    padded_B = _round_up(B, tile_rows)
    if padded_B != B:
        x = jnp.pad(x, ((0, padded_B - B), (0, 0)))

    # Lane-dense packed output (pad columns sliced off below).
    out_used = so + 3 * vo
    out_w = _round_up(out_used, 128)

    # Pack all weights/biases into one lane-dense slab -> one prologue DMA.
    lane_w, rows, n_rows = _weight_layout(si, vi, H, so, vo)
    slab = jnp.zeros((n_rows, lane_w), jnp.float32)
    slab = slab.at[rows["gamma"], :si].set(p["gamma"][0])
    slab = slab.at[rows["beta"], :si].set(p["beta"][0])
    slab = slab.at[rows["bs"], :so].set(p["bs"][0])
    slab = slab.at[rows["bg"], :vo].set(p["bg"][0])
    slab = slab.at[rows["wdown"]:rows["wdown"] + vi, :H].set(p["wdown"])
    slab = slab.at[rows["ws_s"]:rows["ws_s"] + si, :so].set(p["ws_s"])
    slab = slab.at[rows["ws_v"]:rows["ws_v"] + H, :so].set(p["ws_v"])
    slab = slab.at[rows["wup"]:rows["wup"] + H, :vo].set(p["wup"])
    slab = slab.at[rows["wg"]:rows["wg"] + so, :vo].set(p["wg"])

    kernel = _make_kernel(si, vi, H, so, vo, rows, out_w)
    grid = (padded_B // tile_rows,)

    packed = pl.pallas_call(
        kernel,
        out_shape=jax.ShapeDtypeStruct((padded_B, out_w), s.dtype),
        grid=grid,
        in_specs=[
            pl.BlockSpec((tile_rows, in_w), lambda i: (i, 0)),   # fused input slab
            pl.BlockSpec((n_rows, lane_w), lambda i: (0, 0)),    # weight slab
        ],
        out_specs=pl.BlockSpec((tile_rows, out_w), lambda i: (i, 0)),
        compiler_params=pltpu.CompilerParams(
            dimension_semantics=("parallel",),
            vmem_limit_bytes=32 * 1024 * 1024),
    )(x, slab)

    s_out = packed[:B, :so]
    v_out = packed[:B, so:out_used].reshape(B, 3, vo)   # [B, (x,y,z), vo]
    v_out = jnp.transpose(v_out, (0, 2, 1))             # back to [B, vo, 3]
    return s_out, v_out


def gcp_embedding_forward(params, h, chi, e, xi, edge_index=None, f_ij=None):
    """GCPEmbedding.forward: returns ((node_s, node_v), (edge_s, edge_v))."""
    # atom embedding lookup (glue; nn.Embedding == row gather)
    node_s_in = jnp.take(params["atom_emb"], h, axis=0)      # [N, A]
    node_rep = _gcp_embed(node_s_in, chi, params["node"])
    edge_rep = _gcp_embed(e, xi, params["edge"])
    return node_rep, edge_rep


# ----------------------------------------------------------------------------
# Deterministic parameter construction.
# ----------------------------------------------------------------------------
def _init_branch(key, si, vi, so, vo):
    H = max(vi, vo)
    ks = jax.random.split(key, 6)
    sc = lambda fan: 1.0 / jnp.sqrt(jnp.float32(fan))
    return {
        "gamma": jnp.ones((1, si), jnp.float32),
        "beta": jnp.zeros((1, si), jnp.float32),
        "wdown": jax.random.normal(ks[0], (vi, H), jnp.float32) * sc(vi),
        "ws_s": jax.random.normal(ks[1], (si, so), jnp.float32) * sc(si + H),
        "ws_v": jax.random.normal(ks[2], (H, so), jnp.float32) * sc(si + H),
        "bs": jax.random.normal(ks[3], (1, so), jnp.float32) * 0.01,
        "wup": jax.random.normal(ks[4], (H, vo), jnp.float32) * sc(H),
        "wg": jax.random.normal(ks[5], (so, vo), jnp.float32) * sc(so),
        "bg": jnp.zeros((1, vo), jnp.float32),
    }


def init_params(key, num_atom_types, node_in, node_hid, edge_in, edge_hid):
    k0, k1, k2 = jax.random.split(key, 3)
    return {
        "atom_emb": jax.random.normal(
            k0, (num_atom_types, num_atom_types), jnp.float32),
        "node": _init_branch(k1, node_in[0], node_in[1], node_hid[0], node_hid[1]),
        "edge": _init_branch(k2, edge_in[0], edge_in[1], edge_hid[0], edge_hid[1]),
    }


if __name__ == "__main__":
    # Small, module-consistent shapes. N_EDGES is deliberately not a multiple
    # of 8 to exercise the row-padding path; both streams get grid >= 2.
    NUM_ATOM_TYPES = 16
    N_NODES, N_EDGES = 16, 36
    node_input_dims = (NUM_ATOM_TYPES, 4)   # (scalar, vector-channels)
    node_hidden_dims = (32, 8)
    edge_input_dims = (8, 3)
    edge_hidden_dims = (16, 4)

    key = jax.random.PRNGKey(0)
    kp, kh, kchi, ke, kxi = jax.random.split(key, 5)

    params = init_params(kp, NUM_ATOM_TYPES, node_input_dims, node_hidden_dims,
                         edge_input_dims, edge_hidden_dims)

    h = jax.random.randint(kh, (N_NODES,), 0, NUM_ATOM_TYPES, jnp.int32)
    chi = jax.random.normal(kchi, (N_NODES, node_input_dims[1], 3), jnp.float32)
    e = jax.random.normal(ke, (N_EDGES, edge_input_dims[0]), jnp.float32)
    xi = jax.random.normal(kxi, (N_EDGES, edge_input_dims[1], 3), jnp.float32)
    edge_index = jnp.stack([jnp.arange(N_EDGES) % N_NODES,
                            (jnp.arange(N_EDGES) + 1) % N_NODES]).astype(jnp.int32)
    f_ij = jnp.tile(jnp.eye(3, dtype=jnp.float32)[None], (N_EDGES, 1, 1))

    fwd = jax.jit(functools.partial(gcp_embedding_forward, params))
    (node_s, node_v), (edge_s, edge_v) = fwd(h, chi, e, xi, edge_index, f_ij)
    jax.block_until_ready((node_s, node_v, edge_s, edge_v))

    assert node_s.shape == (N_NODES, node_hidden_dims[0])
    assert node_v.shape == (N_NODES, node_hidden_dims[1], 3)
    assert edge_s.shape == (N_EDGES, edge_hidden_dims[0])
    assert edge_v.shape == (N_EDGES, edge_hidden_dims[1], 3)
    assert bool(jnp.all(jnp.isfinite(node_s)) & jnp.all(jnp.isfinite(node_v))
                & jnp.all(jnp.isfinite(edge_s)) & jnp.all(jnp.isfinite(edge_v)))
    print("KERNEL_OK")
</pallas_src>

<mosaic_0001>
module attributes {stable_mosaic.version = 11 : i64} {
  func.func @kernel(%arg0: i32, %arg1: memref<24x17xf32, #tpu.memory_space<vmem>>, %arg2: memref<56x128xf32, #tpu.memory_space<vmem>>, %arg3: memref<24x128xf32, #tpu.memory_space<vmem>>) attributes {dimension_semantics = [#tpu.dimension_semantics<parallel>], iteration_bounds = array<i64: 2>, scalar_prefetch = 0 : i64, scratch_operands = 0 : i64, tpu.core_type = #tpu.core_type<tc>, window_params = [{transform_indices = @transform_0, window_bounds = array<i64: 24, 17>}, {pipeline_mode = #tpu.pipeline_mode<synchronous>, transform_indices = @transform_1, window_bounds = array<i64: 56, 128>}, {transform_indices = @transform_2, window_bounds = array<i64: 24, 128>}]} {
    %c0 = arith.constant 0 : index
    %c0_0 = arith.constant 0 : index
    %0 = vector.load %arg1[%c0, %c0_0] : memref<24x17xf32, #tpu.memory_space<vmem>>, vector<24x17xf32>
    %1 = vector.extract_strided_slice %0 {offsets = [0, 0], sizes = [24, 8], strides = [1, 1]} : vector<24x17xf32> to vector<24x8xf32>
    %2 = vector.extract_strided_slice %0 {offsets = [0, 8], sizes = [24, 3], strides = [1, 1]} : vector<24x17xf32> to vector<24x3xf32>
    %3 = vector.extract_strided_slice %0 {offsets = [0, 11], sizes = [24, 3], strides = [1, 1]} : vector<24x17xf32> to vector<24x3xf32>
    %4 = vector.extract_strided_slice %0 {offsets = [0, 14], sizes = [24, 3], strides = [1, 1]} : vector<24x17xf32> to vector<24x3xf32>
    %c0_1 = arith.constant 0 : index
    %c0_2 = arith.constant 0 : index
    %5 = vector.load %arg2[%c0_1, %c0_2] : memref<56x128xf32, #tpu.memory_space<vmem>>, vector<1x8xf32>
    %c1 = arith.constant 1 : index
    %c0_3 = arith.constant 0 : index
    %6 = vector.load %arg2[%c1, %c0_3] : memref<56x128xf32, #tpu.memory_space<vmem>>, vector<1x8xf32>
    %c2 = arith.constant 2 : index
    %c0_4 = arith.constant 0 : index
    %7 = vector.load %arg2[%c2, %c0_4] : memref<56x128xf32, #tpu.memory_space<vmem>>, vector<1x16xf32>
    %c3 = arith.constant 3 : index
    %c0_5 = arith.constant 0 : index
    %8 = vector.load %arg2[%c3, %c0_5] : memref<56x128xf32, #tpu.memory_space<vmem>>, vector<1x4xf32>
    %c8 = arith.constant 8 : index
    %c0_6 = arith.constant 0 : index
    %9 = vector.load %arg2[%c8, %c0_6] : memref<56x128xf32, #tpu.memory_space<vmem>>, vector<3x4xf32>
    %c16 = arith.constant 16 : index
    %c0_7 = arith.constant 0 : index
    %10 = vector.load %arg2[%c16, %c0_7] : memref<56x128xf32, #tpu.memory_space<vmem>>, vector<8x16xf32>
    %c24 = arith.constant 24 : index
    %c0_8 = arith.constant 0 : index
    %11 = vector.load %arg2[%c24, %c0_8] : memref<56x128xf32, #tpu.memory_space<vmem>>, vector<4x16xf32>
    %c32 = arith.constant 32 : index
    %c0_9 = arith.constant 0 : index
    %12 = vector.load %arg2[%c32, %c0_9] : memref<56x128xf32, #tpu.memory_space<vmem>>, vector<4x4xf32>
    %c40 = arith.constant 40 : index
    %c0_10 = arith.constant 0 : index
    %13 = vector.load %arg2[%c40, %c0_10] : memref<56x128xf32, #tpu.memory_space<vmem>>, vector<16x4xf32>
    %cst = arith.constant dense<0.000000e+00> : vector<24xf32>
    %14 = vector.multi_reduction <add>, %1, %cst [1] : vector<24x8xf32> to vector<24xf32>
    %15 = vector.shape_cast %14 : vector<24xf32> to vector<24x1xf32>
    %cst_11 = arith.constant 8.000000e+00 : f32
    %16 = vector.broadcast %cst_11 : f32 to vector<24x1xf32>
    %17 = arith.divf %15, %16 : vector<24x1xf32>
    %18 = vector.broadcast %17 : vector<24x1xf32> to vector<24x8xf32>
    %19 = arith.subf %1, %18 : vector<24x8xf32>
    %20 = arith.mulf %19, %19 : vector<24x8xf32>
    %cst_12 = arith.constant dense<0.000000e+00> : vector<24xf32>
    %21 = vector.multi_reduction <add>, %20, %cst_12 [1] : vector<24x8xf32> to vector<24xf32>
    %22 = vector.shape_cast %21 : vector<24xf32> to vector<24x1xf32>
    %cst_13 = arith.constant 8.000000e+00 : f32
    %23 = vector.broadcast %cst_13 : f32 to vector<24x1xf32>
    %24 = arith.divf %22, %23 : vector<24x1xf32>
    %25 = vector.broadcast %17 : vector<24x1xf32> to vector<24x8xf32>
    %26 = arith.subf %1, %25 : vector<24x8xf32>
    %cst_14 = arith.constant 9.99999974E-6 : f32
    %27 = vector.broadcast %cst_14 : f32 to vector<24x1xf32>
    %28 = arith.addf %24, %27 : vector<24x1xf32>
    %29 = math.rsqrt %28 : vector<24x1xf32>
    %30 = vector.broadcast %29 : vector<24x1xf32> to vector<24x8xf32>
    %31 = arith.mulf %26, %30 : vector<24x8xf32>
    %32 = vector.broadcast %5 : vector<1x8xf32> to vector<24x8xf32>
    %33 = arith.mulf %31, %32 : vector<24x8xf32>
    %34 = vector.broadcast %6 : vector<1x8xf32> to vector<24x8xf32>
    %35 = arith.addf %33, %34 : vector<24x8xf32>
    %36 = arith.mulf %2, %2 : vector<24x3xf32>
    %37 = arith.mulf %3, %3 : vector<24x3xf32>
    %38 = arith.addf %36, %37 : vector<24x3xf32>
    %39 = arith.mulf %4, %4 : vector<24x3xf32>
    %40 = arith.addf %38, %39 : vector<24x3xf32>
    %cst_15 = arith.constant 9.99999993E-9 : f32
    %41 = vector.broadcast %cst_15 : f32 to vector<24x3xf32>
    %42 = arith.maximumf %40, %41 : vector<24x3xf32>
    %cst_16 = arith.constant dense<0.000000e+00> : vector<24xf32>
    %43 = vector.multi_reduction <add>, %42, %cst_16 [1] : vector<24x3xf32> to vector<24xf32>
    %44 = vector.shape_cast %43 : vector<24xf32> to vector<24x1xf32>
    %cst_17 = arith.constant 3.000000e+00 : f32
    %45 = vector.broadcast %cst_17 : f32 to vector<24x1xf32>
    %46 = arith.divf %44, %45 : vector<24x1xf32>
    %47 = math.rsqrt %46 : vector<24x1xf32>
    %48 = vector.broadcast %47 : vector<24x1xf32> to vector<24x3xf32>
    %49 = arith.mulf %2, %48 : vector<24x3xf32>
    %50 = vector.broadcast %47 : vector<24x1xf32> to vector<24x3xf32>
    %51 = arith.mulf %3, %50 : vector<24x3xf32>
    %52 = vector.broadcast %47 : vector<24x1xf32> to vector<24x3xf32>
    %53 = arith.mulf %4, %52 : vector<24x3xf32>
    %cst_18 = arith.constant dense<0.000000e+00> : vector<24x4xf32>
    %54 = tpu.matmul %49, %9, %cst_18 {dimension_numbers = #tpu.dot_dimension_numbers<[1], [0], [0], [1], [0, 0, 1, 1], [], []>} : vector<24x3xf32>, vector<3x4xf32>, vector<24x4xf32> -> vector<24x4xf32>
    %cst_19 = arith.constant dense<0.000000e+00> : vector<24x4xf32>
    %55 = tpu.matmul %51, %9, %cst_19 {dimension_numbers = #tpu.dot_dimension_numbers<[1], [0], [0], [1], [0, 0, 1, 1], [], []>} : vector<24x3xf32>, vector<3x4xf32>, vector<24x4xf32> -> vector<24x4xf32>
    %cst_20 = arith.constant dense<0.000000e+00> : vector<24x4xf32>
    %56 = tpu.matmul %53, %9, %cst_20 {dimension_numbers = #tpu.dot_dimension_numbers<[1], [0], [0], [1], [0, 0, 1, 1], [], []>} : vector<24x3xf32>, vector<3x4xf32>, vector<24x4xf32> -> vector<24x4xf32>
    %57 = arith.mulf %54, %54 : vector<24x4xf32>
    %58 = arith.mulf %55, %55 : vector<24x4xf32>
    %59 = arith.addf %57, %58 : vector<24x4xf32>
    %60 = arith.mulf %56, %56 : vector<24x4xf32>
    %61 = arith.addf %59, %60 : vector<24x4xf32>
    %cst_21 = arith.constant 9.99999993E-9 : f32
    %62 = vector.broadcast %cst_21 : f32 to vector<24x4xf32>
    %63 = arith.maximumf %61, %62 : vector<24x4xf32>
    %64 = math.sqrt %63 : vector<24x4xf32>
    %cst_22 = arith.constant dense<0.000000e+00> : vector<24x16xf32>
    %65 = tpu.matmul %35, %10, %cst_22 {dimension_numbers = #tpu.dot_dimension_numbers<[1], [0], [0], [1], [0, 0, 1, 1], [], []>} : vector<24x8xf32>, vector<8x16xf32>, vector<24x16xf32> -> vector<24x16xf32>
    %cst_23 = arith.constant dense<0.000000e+00> : vector<24x16xf32>
    %66 = tpu.matmul %64, %11, %cst_23 {dimension_numbers = #tpu.dot_dimension_numbers<[1], [0], [0], [1], [0, 0, 1, 1], [], []>} : vector<24x4xf32>, vector<4x16xf32>, vector<24x16xf32> -> vector<24x16xf32>
    %67 = arith.addf %65, %66 : vector<24x16xf32>
    %68 = vector.broadcast %7 : vector<1x16xf32> to vector<24x16xf32>
    %69 = arith.addf %67, %68 : vector<24x16xf32>
    %cst_24 = arith.constant dense<0.000000e+00> : vector<24x4xf32>
    %70 = tpu.matmul %69, %13, %cst_24 {dimension_numbers = #tpu.dot_dimension_numbers<[1], [0], [0], [1], [0, 0, 1, 1], [], []>} : vector<24x16xf32>, vector<16x4xf32>, vector<24x4xf32> -> vector<24x4xf32>
    %71 = vector.broadcast %8 : vector<1x4xf32> to vector<24x4xf32>
    %72 = arith.addf %70, %71 : vector<24x4xf32>
    %73 = arith.negf %72 : vector<24x4xf32>
    %74 = math.exp %73 : vector<24x4xf32>
    %cst_25 = arith.constant 1.000000e+00 : f32
    %75 = vector.broadcast %cst_25 : f32 to vector<24x4xf32>
    %76 = arith.addf %75, %74 : vector<24x4xf32>
    %77 = arith.divf %75, %76 : vector<24x4xf32>
    %cst_26 = arith.constant dense<0.000000e+00> : vector<24x4xf32>
    %78 = tpu.matmul %54, %12, %cst_26 {dimension_numbers = #tpu.dot_dimension_numbers<[1], [0], [0], [1], [0, 0, 1, 1], [], []>} : vector<24x4xf32>, vector<4x4xf32>, vector<24x4xf32> -> vector<24x4xf32>
    %79 = arith.mulf %78, %77 : vector<24x4xf32>
    %cst_27 = arith.constant dense<0.000000e+00> : vector<24x4xf32>
    %80 = tpu.matmul %55, %12, %cst_27 {dimension_numbers = #tpu.dot_dimension_numbers<[1], [0], [0], [1], [0, 0, 1, 1], [], []>} : vector<24x4xf32>, vector<4x4xf32>, vector<24x4xf32> -> vector<24x4xf32>
    %81 = arith.mulf %80, %77 : vector<24x4xf32>
    %cst_28 = arith.constant dense<0.000000e+00> : vector<24x4xf32>
    %82 = tpu.matmul %56, %12, %cst_28 {dimension_numbers = #tpu.dot_dimension_numbers<[1], [0], [0], [1], [0, 0, 1, 1], [], []>} : vector<24x4xf32>, vector<4x4xf32>, vector<24x4xf32> -> vector<24x4xf32>
    %83 = arith.mulf %82, %77 : vector<24x4xf32>
    %c0_29 = arith.constant 0 : index
    %c0_30 = arith.constant 0 : index
    %84 = vector.load %arg3[%c0_29, %c0_30] : memref<24x128xf32, #tpu.memory_space<vmem>>, vector<24x16xf32>
    tpu.vector_store %arg3[%c0_29, %c0_30], %69 {strides = array<i32>} : memref<24x128xf32, #tpu.memory_space<vmem>>, vector<24x16xf32>,
    %c0_31 = arith.constant 0 : index
    %c16_32 = arith.constant 16 : index
    %85 = vector.load %arg3[%c0_31, %c16_32] : memref<24x128xf32, #tpu.memory_space<vmem>>, vector<24x4xf32>
    tpu.vector_store %arg3[%c0_31, %c16_32], %79 {strides = array<i32>} : memref<24x128xf32, #tpu.memory_space<vmem>>, vector<24x4xf32>,
    %c0_33 = arith.constant 0 : index
    %c20 = arith.constant 20 : index
    %86 = vector.load %arg3[%c0_33, %c20] : memref<24x128xf32, #tpu.memory_space<vmem>>, vector<24x4xf32>
    tpu.vector_store %arg3[%c0_33, %c20], %81 {strides = array<i32>} : memref<24x128xf32, #tpu.memory_space<vmem>>, vector<24x4xf32>,
    %c0_34 = arith.constant 0 : index
    %c24_35 = arith.constant 24 : index
    %87 = vector.load %arg3[%c0_34, %c24_35] : memref<24x128xf32, #tpu.memory_space<vmem>>, vector<24x4xf32>
    tpu.vector_store %arg3[%c0_34, %c24_35], %83 {strides = array<i32>} : memref<24x128xf32, #tpu.memory_space<vmem>>, vector<24x4xf32>,
    %cst_36 = arith.constant 0.000000e+00 : f32
    %88 = vector.broadcast %cst_36 : f32 to vector<24x100xf32>
    %c0_37 = arith.constant 0 : index
    %c28 = arith.constant 28 : index
    %89 = vector.load %arg3[%c0_37, %c28] : memref<24x128xf32, #tpu.memory_space<vmem>>, vector<24x100xf32>
    tpu.vector_store %arg3[%c0_37, %c28], %88 {strides = array<i32>} : memref<24x128xf32, #tpu.memory_space<vmem>>, vector<24x100xf32>,
    return
  }
  func.func @transform_0(%arg0: i32) -> (i32, i32) {
    %c0_i32 = arith.constant 0 : i32
    %c0_i32_0 = arith.constant 0 : i32
    return %arg0, %c0_i32 : i32, i32
  }
  func.func @transform_1(%arg0: i32) -> (i32, i32) {
    %c0_i32 = arith.constant 0 : i32
    %c0_i32_0 = arith.constant 0 : i32
    %c0_i32_1 = arith.constant 0 : i32
    return %c0_i32, %c0_i32_0 : i32, i32
  }
  func.func @transform_2(%arg0: i32) -> (i32, i32) {
    %c0_i32 = arith.constant 0 : i32
    %c0_i32_0 = arith.constant 0 : i32
    return %arg0, %c0_i32 : i32, i32
  }
}

module attributes {stable_mosaic.version = 11 : i64} {
  func.func @kernel(%arg0: i32, %arg1: memref<8x28xf32, #tpu.memory_space<vmem>>, %arg2: memref<80x128xf32, #tpu.memory_space<vmem>>, %arg3: memref<8x128xf32, #tpu.memory_space<vmem>>) attributes {dimension_semantics = [#tpu.dimension_semantics<parallel>], iteration_bounds = array<i64: 2>, scalar_prefetch = 0 : i64, scratch_operands = 0 : i64, tpu.core_type = #tpu.core_type<tc>, window_params = [{transform_indices = @transform_0, window_bounds = array<i64: 8, 28>}, {pipeline_mode = #tpu.pipeline_mode<synchronous>, transform_indices = @transform_1, window_bounds = array<i64: 80, 128>}, {transform_indices = @transform_2, window_bounds = array<i64: 8, 128>}]} {
    %c0 = arith.constant 0 : index
    %c0_0 = arith.constant 0 : index
    %0 = vector.load %arg1[%c0, %c0_0] : memref<8x28xf32, #tpu.memory_space<vmem>>, vector<8x28xf32>
    %1 = vector.extract_strided_slice %0 {offsets = [0, 0], sizes = [8, 16], strides = [1, 1]} : vector<8x28xf32> to vector<8x16xf32>
    %2 = vector.extract_strided_slice %0 {offsets = [0, 16], sizes = [8, 4], strides = [1, 1]} : vector<8x28xf32> to vector<8x4xf32>
    %3 = vector.extract_strided_slice %0 {offsets = [0, 20], sizes = [8, 4], strides = [1, 1]} : vector<8x28xf32> to vector<8x4xf32>
    %4 = vector.extract_strided_slice %0 {offsets = [0, 24], sizes = [8, 4], strides = [1, 1]} : vector<8x28xf32> to vector<8x4xf32>
    %c0_1 = arith.constant 0 : index
    %c0_2 = arith.constant 0 : index
    %5 = vector.load %arg2[%c0_1, %c0_2] : memref<80x128xf32, #tpu.memory_space<vmem>>, vector<1x16xf32>
    %c1 = arith.constant 1 : index
    %c0_3 = arith.constant 0 : index
    %6 = vector.load %arg2[%c1, %c0_3] : memref<80x128xf32, #tpu.memory_space<vmem>>, vector<1x16xf32>
    %c2 = arith.constant 2 : index
    %c0_4 = arith.constant 0 : index
    %7 = vector.load %arg2[%c2, %c0_4] : memref<80x128xf32, #tpu.memory_space<vmem>>, vector<1x32xf32>
    %c3 = arith.constant 3 : index
    %c0_5 = arith.constant 0 : index
    %8 = vector.load %arg2[%c3, %c0_5] : memref<80x128xf32, #tpu.memory_space<vmem>>, vector<1x8xf32>
    %c8 = arith.constant 8 : index
    %c0_6 = arith.constant 0 : index
    %9 = vector.load %arg2[%c8, %c0_6] : memref<80x128xf32, #tpu.memory_space<vmem>>, vector<4x8xf32>
    %c16 = arith.constant 16 : index
    %c0_7 = arith.constant 0 : index
    %10 = vector.load %arg2[%c16, %c0_7] : memref<80x128xf32, #tpu.memory_space<vmem>>, vector<16x32xf32>
    %c32 = arith.constant 32 : index
    %c0_8 = arith.constant 0 : index
    %11 = vector.load %arg2[%c32, %c0_8] : memref<80x128xf32, #tpu.memory_space<vmem>>, vector<8x32xf32>
    %c40 = arith.constant 40 : index
    %c0_9 = arith.constant 0 : index
    %12 = vector.load %arg2[%c40, %c0_9] : memref<80x128xf32, #tpu.memory_space<vmem>>, vector<8x8xf32>
    %c48 = arith.constant 48 : index
    %c0_10 = arith.constant 0 : index
    %13 = vector.load %arg2[%c48, %c0_10] : memref<80x128xf32, #tpu.memory_space<vmem>>, vector<32x8xf32>
    %cst = arith.constant dense<0.000000e+00> : vector<8xf32>
    %14 = vector.multi_reduction <add>, %1, %cst [1] : vector<8x16xf32> to vector<8xf32>
    %15 = vector.shape_cast %14 : vector<8xf32> to vector<8x1xf32>
    %cst_11 = arith.constant 1.600000e+01 : f32
    %16 = vector.broadcast %cst_11 : f32 to vector<8x1xf32>
    %17 = arith.divf %15, %16 : vector<8x1xf32>
    %18 = vector.broadcast %17 : vector<8x1xf32> to vector<8x16xf32>
    %19 = arith.subf %1, %18 : vector<8x16xf32>
    %20 = arith.mulf %19, %19 : vector<8x16xf32>
    %cst_12 = arith.constant dense<0.000000e+00> : vector<8xf32>
    %21 = vector.multi_reduction <add>, %20, %cst_12 [1] : vector<8x16xf32> to vector<8xf32>
    %22 = vector.shape_cast %21 : vector<8xf32> to vector<8x1xf32>
    %cst_13 = arith.constant 1.600000e+01 : f32
    %23 = vector.broadcast %cst_13 : f32 to vector<8x1xf32>
    %24 = arith.divf %22, %23 : vector<8x1xf32>
    %25 = vector.broadcast %17 : vector<8x1xf32> to vector<8x16xf32>
    %26 = arith.subf %1, %25 : vector<8x16xf32>
    %cst_14 = arith.constant 9.99999974E-6 : f32
    %27 = vector.broadcast %cst_14 : f32 to vector<8x1xf32>
    %28 = arith.addf %24, %27 : vector<8x1xf32>
    %29 = math.rsqrt %28 : vector<8x1xf32>
    %30 = vector.broadcast %29 : vector<8x1xf32> to vector<8x16xf32>
    %31 = arith.mulf %26, %30 : vector<8x16xf32>
    %32 = vector.broadcast %5 : vector<1x16xf32> to vector<8x16xf32>
    %33 = arith.mulf %31, %32 : vector<8x16xf32>
    %34 = vector.broadcast %6 : vector<1x16xf32> to vector<8x16xf32>
    %35 = arith.addf %33, %34 : vector<8x16xf32>
    %36 = arith.mulf %2, %2 : vector<8x4xf32>
    %37 = arith.mulf %3, %3 : vector<8x4xf32>
    %38 = arith.addf %36, %37 : vector<8x4xf32>
    %39 = arith.mulf %4, %4 : vector<8x4xf32>
    %40 = arith.addf %38, %39 : vector<8x4xf32>
    %cst_15 = arith.constant 9.99999993E-9 : f32
    %41 = vector.broadcast %cst_15 : f32 to vector<8x4xf32>
    %42 = arith.maximumf %40, %41 : vector<8x4xf32>
    %cst_16 = arith.constant dense<0.000000e+00> : vector<8xf32>
    %43 = vector.multi_reduction <add>, %42, %cst_16 [1] : vector<8x4xf32> to vector<8xf32>
    %44 = vector.shape_cast %43 : vector<8xf32> to vector<8x1xf32>
    %cst_17 = arith.constant 4.000000e+00 : f32
    %45 = vector.broadcast %cst_17 : f32 to vector<8x1xf32>
    %46 = arith.divf %44, %45 : vector<8x1xf32>
    %47 = math.rsqrt %46 : vector<8x1xf32>
    %48 = vector.broadcast %47 : vector<8x1xf32> to vector<8x4xf32>
    %49 = arith.mulf %2, %48 : vector<8x4xf32>
    %50 = vector.broadcast %47 : vector<8x1xf32> to vector<8x4xf32>
    %51 = arith.mulf %3, %50 : vector<8x4xf32>
    %52 = vector.broadcast %47 : vector<8x1xf32> to vector<8x4xf32>
    %53 = arith.mulf %4, %52 : vector<8x4xf32>
    %cst_18 = arith.constant dense<0.000000e+00> : vector<8x8xf32>
    %54 = tpu.matmul %49, %9, %cst_18 {dimension_numbers = #tpu.dot_dimension_numbers<[1], [0], [0], [1], [0, 0, 1, 1], [], []>} : vector<8x4xf32>, vector<4x8xf32>, vector<8x8xf32> -> vector<8x8xf32>
    %cst_19 = arith.constant dense<0.000000e+00> : vector<8x8xf32>
    %55 = tpu.matmul %51, %9, %cst_19 {dimension_numbers = #tpu.dot_dimension_numbers<[1], [0], [0], [1], [0, 0, 1, 1], [], []>} : vector<8x4xf32>, vector<4x8xf32>, vector<8x8xf32> -> vector<8x8xf32>
    %cst_20 = arith.constant dense<0.000000e+00> : vector<8x8xf32>
    %56 = tpu.matmul %53, %9, %cst_20 {dimension_numbers = #tpu.dot_dimension_numbers<[1], [0], [0], [1], [0, 0, 1, 1], [], []>} : vector<8x4xf32>, vector<4x8xf32>, vector<8x8xf32> -> vector<8x8xf32>
    %57 = arith.mulf %54, %54 : vector<8x8xf32>
    %58 = arith.mulf %55, %55 : vector<8x8xf32>
    %59 = arith.addf %57, %58 : vector<8x8xf32>
    %60 = arith.mulf %56, %56 : vector<8x8xf32>
    %61 = arith.addf %59, %60 : vector<8x8xf32>
    %cst_21 = arith.constant 9.99999993E-9 : f32
    %62 = vector.broadcast %cst_21 : f32 to vector<8x8xf32>
    %63 = arith.maximumf %61, %62 : vector<8x8xf32>
    %64 = math.sqrt %63 : vector<8x8xf32>
    %cst_22 = arith.constant dense<0.000000e+00> : vector<8x32xf32>
    %65 = tpu.matmul %35, %10, %cst_22 {dimension_numbers = #tpu.dot_dimension_numbers<[1], [0], [0], [1], [0, 0, 1, 1], [], []>} : vector<8x16xf32>, vector<16x32xf32>, vector<8x32xf32> -> vector<8x32xf32>
    %cst_23 = arith.constant dense<0.000000e+00> : vector<8x32xf32>
    %66 = tpu.matmul %64, %11, %cst_23 {dimension_numbers = #tpu.dot_dimension_numbers<[1], [0], [0], [1], [0, 0, 1, 1], [], []>} : vector<8x8xf32>, vector<8x32xf32>, vector<8x32xf32> -> vector<8x32xf32>
    %67 = arith.addf %65, %66 : vector<8x32xf32>
    %68 = vector.broadcast %7 : vector<1x32xf32> to vector<8x32xf32>
    %69 = arith.addf %67, %68 : vector<8x32xf32>
    %cst_24 = arith.constant dense<0.000000e+00> : vector<8x8xf32>
    %70 = tpu.matmul %69, %13, %cst_24 {dimension_numbers = #tpu.dot_dimension_numbers<[1], [0], [0], [1], [0, 0, 1, 1], [], []>} : vector<8x32xf32>, vector<32x8xf32>, vector<8x8xf32> -> vector<8x8xf32>
    %71 = vector.broadcast %8 : vector<1x8xf32> to vector<8x8xf32>
    %72 = arith.addf %70, %71 : vector<8x8xf32>
    %73 = arith.negf %72 : vector<8x8xf32>
    %74 = math.exp %73 : vector<8x8xf32>
    %cst_25 = arith.constant 1.000000e+00 : f32
    %75 = vector.broadcast %cst_25 : f32 to vector<8x8xf32>
    %76 = arith.addf %75, %74 : vector<8x8xf32>
    %77 = arith.divf %75, %76 : vector<8x8xf32>
    %cst_26 = arith.constant dense<0.000000e+00> : vector<8x8xf32>
    %78 = tpu.matmul %54, %12, %cst_26 {dimension_numbers = #tpu.dot_dimension_numbers<[1], [0], [0], [1], [0, 0, 1, 1], [], []>} : vector<8x8xf32>, vector<8x8xf32>, vector<8x8xf32> -> vector<8x8xf32>
    %79 = arith.mulf %78, %77 : vector<8x8xf32>
    %cst_27 = arith.constant dense<0.000000e+00> : vector<8x8xf32>
    %80 = tpu.matmul %55, %12, %cst_27 {dimension_numbers = #tpu.dot_dimension_numbers<[1], [0], [0], [1], [0, 0, 1, 1], [], []>} : vector<8x8xf32>, vector<8x8xf32>, vector<8x8xf32> -> vector<8x8xf32>
    %81 = arith.mulf %80, %77 : vector<8x8xf32>
    %cst_28 = arith.constant dense<0.000000e+00> : vector<8x8xf32>
    %82 = tpu.matmul %56, %12, %cst_28 {dimension_numbers = #tpu.dot_dimension_numbers<[1], [0], [0], [1], [0, 0, 1, 1], [], []>} : vector<8x8xf32>, vector<8x8xf32>, vector<8x8xf32> -> vector<8x8xf32>
    %83 = arith.mulf %82, %77 : vector<8x8xf32>
    %c0_29 = arith.constant 0 : index
    %c0_30 = arith.constant 0 : index
    %84 = vector.load %arg3[%c0_29, %c0_30] : memref<8x128xf32, #tpu.memory_space<vmem>>, vector<8x32xf32>
    tpu.vector_store %arg3[%c0_29, %c0_30], %69 {strides = array<i32>} : memref<8x128xf32, #tpu.memory_space<vmem>>, vector<8x32xf32>,
    %c0_31 = arith.constant 0 : index
    %c32_32 = arith.constant 32 : index
    %85 = vector.load %arg3[%c0_31, %c32_32] : memref<8x128xf32, #tpu.memory_space<vmem>>, vector<8x8xf32>
    tpu.vector_store %arg3[%c0_31, %c32_32], %79 {strides = array<i32>} : memref<8x128xf32, #tpu.memory_space<vmem>>, vector<8x8xf32>,
    %c0_33 = arith.constant 0 : index
    %c40_34 = arith.constant 40 : index
    %86 = vector.load %arg3[%c0_33, %c40_34] : memref<8x128xf32, #tpu.memory_space<vmem>>, vector<8x8xf32>
    tpu.vector_store %arg3[%c0_33, %c40_34], %81 {strides = array<i32>} : memref<8x128xf32, #tpu.memory_space<vmem>>, vector<8x8xf32>,
    %c0_35 = arith.constant 0 : index
    %c48_36 = arith.constant 48 : index
    %87 = vector.load %arg3[%c0_35, %c48_36] : memref<8x128xf32, #tpu.memory_space<vmem>>, vector<8x8xf32>
    tpu.vector_store %arg3[%c0_35, %c48_36], %83 {strides = array<i32>} : memref<8x128xf32, #tpu.memory_space<vmem>>, vector<8x8xf32>,
    %cst_37 = arith.constant 0.000000e+00 : f32
    %88 = vector.broadcast %cst_37 : f32 to vector<8x72xf32>
    %c0_38 = arith.constant 0 : index
    %c56 = arith.constant 56 : index
    %89 = vector.load %arg3[%c0_38, %c56] : memref<8x128xf32, #tpu.memory_space<vmem>>, vector<8x72xf32>
    tpu.vector_store %arg3[%c0_38, %c56], %88 {strides = array<i32>} : memref<8x128xf32, #tpu.memory_space<vmem>>, vector<8x72xf32>,
    return
  }
  func.func @transform_0(%arg0: i32) -> (i32, i32) {
    %c0_i32 = arith.constant 0 : i32
    %c0_i32_0 = arith.constant 0 : i32
    return %arg0, %c0_i32 : i32, i32
  }
  func.func @transform_1(%arg0: i32) -> (i32, i32) {
    %c0_i32 = arith.constant 0 : i32
    %c0_i32_0 = arith.constant 0 : i32
    %c0_i32_1 = arith.constant 0 : i32
    return %c0_i32, %c0_i32_0 : i32, i32
  }
  func.func @transform_2(%arg0: i32) -> (i32, i32) {
    %c0_i32 = arith.constant 0 : i32
    %c0_i32_0 = arith.constant 0 : i32
    return %arg0, %c0_i32 : i32, i32
  }
}

</mosaic_0001>

<llo_original>
// kernel: gcp_embedding_forward.3
$region0: #{gcp_embedding_forward.3}
  #allocation0 [shape = 'u32[]', space=smem, size = 0x4, offset = 0x4, fixed_abs, tag = 'smem constant byte address 0x4 - core index']
  #allocation1 [shape = 'u32[144,128]{1,0:T(1,128)}', space=vmem, size = 0x12000, scoped, tag = 'internal scratch']
  %s0 = inlined_call_operand.vmem [shape: f32[48,17], index: 0, kind: input, shape index: {}]
  %s1 = inlined_call_operand.vmem [shape: f32[56,128], index: 1, kind: input, shape index: {}]
  %s2 = inlined_call_operand.vmem [shape: f32[48,128], index: 2, kind: output, shape index: {}]
  %s3 = sld [smem:[#allocation0]]
  $region41: #{gcp_embedding_forward.3} parent=0
    _
  %s5 = ssub.s32 1, %s3
  %s6 = scalar_select 0, %s5, %s3
  loop: start=0, step=1, limit=4
  $region2: #{gcp_embedding_forward.3} parent=0 // loop_pre_header
    _
  $region3: #{gcp_embedding_forward.3} parent=0 // loop_header
    %s8 = sphi 0, %s12
    %p9 = scmp.ge.s32.totalorder %s8, 4
    %s18 = sphi 0, %s20
    %s21 = sphi 0, %s18
    %s22 = sphi 0, %s21
    %s38 = sphi 0, %s22
    %s42 = sphi 0, %s42
    %s44 = sphi 0, %s42
    %s45 = sphi 0, %s44
    %s59 = sphi 0, %s45
    %s65 = sphi 0, %s67
    %s68 = sphi 0, %s65
    %s69 = sphi 0, %s68
    %s85 = sphi 0, %s69
  $region4: #{gcp_embedding_forward.3} parent=0 // loop_header_branch
    %11 = sbr.rel (%p9) target = $region8
  $region5: #{gcp_embedding_forward.3} parent=0 // loop_body
    %s13 = ssub.s32 %s8, 1
    %s14 = ssub.s32 %s8, 2
    %s15 = sadd.s32 %s8, 1
    %s16 = ssub.s32 %s8, %s15
    %p17 = scmp.eq.s32.totalorder %s16, 0
    %s19 = sadd.s32 %s18, 1
    %s20 = scalar_select %p17, %s18, %s19
    %p23 = pneg %p17
    %p24 = scmp.eq.s32.totalorder %s8, 1
    %p25 = por %p23, %p24
    %p26 = scmp.ne.s32.totalorder %s18, %s21
    %p27 = scmp.eq.s32.totalorder %s8, 0
    %p28 = por %p26, %p27
    %p29 = scmp.ne.s32.totalorder %s18, %s21
    %p30 = scmp.eq.s32.totalorder %s13, 1
    %p31 = por %p29, %p30
    %p32 = scmp.ne.s32.totalorder %s21, %s22
    %p33 = scmp.eq.s32.totalorder %s13, 0
    %p34 = por %p32, %p33
    %p35 = scmp.ne.s32.totalorder %s21, %s22
    %p36 = scmp.eq.s32.totalorder %s14, 1
    %p37 = por %p35, %p36
    %p39 = scmp.ne.s32.totalorder %s22, %s38
    %p40 = scmp.eq.s32.totalorder %s14, 0
    %p41 = por %p39, %p40
    %s43 = sadd.s32 %s42, 1
    %p46 = scmp.eq.s32.totalorder %s8, 1
    %p47 = scmp.ne.s32.totalorder %s42, %s44
    %p48 = scmp.eq.s32.totalorder %s8, 0
    %p49 = por %p47, %p48
    %p50 = scmp.ne.s32.totalorder %s42, %s44
    %p51 = scmp.eq.s32.totalorder %s13, 1
    %p52 = por %p50, %p51
    %p53 = scmp.ne.s32.totalorder %s44, %s45
    %p54 = scmp.eq.s32.totalorder %s13, 0
    %p55 = por %p53, %p54
    %p56 = scmp.ne.s32.totalorder %s44, %s45
    %p57 = scmp.eq.s32.totalorder %s14, 1
    %p58 = por %p56, %p57
    %p60 = scmp.ne.s32.totalorder %s45, %s59
    %p61 = scmp.eq.s32.totalorder %s14, 0
    %p62 = por %p60, %p61
    %s63 = ssub.s32 %s8, %s15
    %p64 = scmp.eq.s32.totalorder %s63, 0
    %s66 = sadd.s32 %s65, 1
    %s67 = scalar_select %p64, %s65, %s66
    %p70 = pneg %p64
    %p71 = scmp.eq.s32.totalorder %s8, 1
    %p72 = por %p70, %p71
    %p73 = scmp.ne.s32.totalorder %s65, %s68
    %p74 = scmp.eq.s32.totalorder %s8, 0
    %p75 = por %p73, %p74
    %p76 = scmp.ne.s32.totalorder %s65, %s68
    %p77 = scmp.eq.s32.totalorder %s13, 1
    %p78 = por %p76, %p77
    %p79 = scmp.ne.s32.totalorder %s68, %s69
    %p80 = scmp.eq.s32.totalorder %s13, 0
    %p81 = por %p79, %p80
    %p82 = scmp.ne.s32.totalorder %s68, %s69
    %p83 = scmp.eq.s32.totalorder %s14, 1
    %p84 = por %p82, %p83
    %p86 = scmp.ne.s32.totalorder %s69, %s85
    %p87 = scmp.eq.s32.totalorder %s14, 0
    %p88 = por %p86, %p87
    %p89 = scmp.le.s32.totalorder 1, %s8
    %p90 = scmp.lt.s32.totalorder %s8, 3
    %p91 = pnand %p89, %p90
    %p92 = pneg %p91
    // Predicated region
    $region9: #{gcp_embedding_forward.3} parent=5 // pred_check
      _
    $region10: #{gcp_embedding_forward.3} parent=5 // pred_check_branch
      %94 = sbr.rel (%p91) target = $region12
    $region11: #{gcp_embedding_forward.3} parent=5 // pred_region
      %s95 = ssub.s32 %s8, 1
      // Predicated region
      $region13: #{gcp_embedding_forward.3} parent=11 // pred_check
        %p96 = pneg %p55
      $region14: #{gcp_embedding_forward.3} parent=11 // pred_check_branch
        %98 = sbr.rel (%p96) target = $region16
      $region15: #{gcp_embedding_forward.3} parent=11 // pred_region
        _
      $region16: #{gcp_embedding_forward.3} parent=11 // pred_fallthru
        _
    $region12: #{gcp_embedding_forward.3} parent=5 // pred_fallthru
      _
    %p99 = scmp.lt.s32.totalorder %s8, 2
    // Predicated region
    $region17: #{gcp_embedding_forward.3} parent=5 // pred_check
      %p100 = pneg %p99
    $region18: #{gcp_embedding_forward.3} parent=5 // pred_check_branch
      %102 = sbr.rel (%p100) target = $region20
    $region19: #{gcp_embedding_forward.3} parent=5 // pred_region
      // Predicated region
      $region21: #{gcp_embedding_forward.3} parent=19 // pred_check
        %p103 = pneg %p28
      $region22: #{gcp_embedding_forward.3} parent=19 // pred_check_branch
        %105 = sbr.rel (%p103) target = $region24
      $region23: #{gcp_embedding_forward.3} parent=19 // pred_region
        %s106 = smul.u32 3, %s8
        %p107 = scmp.lt.s32.totalorder %s106, 5
        %s108 = scalar_select %p107, %s106, 5
        %s109 = smul.addr %s108, 8
        %s110 = scalar_lea.vmem %s0, %s109
        %s111 = smul.u32 3, %s8
      $region24: #{gcp_embedding_forward.3} parent=19 // pred_fallthru
        _
    $region20: #{gcp_embedding_forward.3} parent=5 // pred_fallthru
      _
    %p112 = scmp.le.s32.totalorder 1, %s8
    %p113 = scmp.lt.s32.totalorder %s8, 3
    %p114 = pnand %p112, %p113
    %p115 = pneg %p114
    // Predicated region
    $region25: #{gcp_embedding_forward.3} parent=5 // pred_check
      _
    $region26: #{gcp_embedding_forward.3} parent=5 // pred_check_branch
      %117 = sbr.rel (%p114) target = $region28
    $region27: #{gcp_embedding_forward.3} parent=5 // pred_region
      %s118 = ssub.s32 %s8, 1
      %s119 = smul.u32 3, %s13
      %p120 = scmp.lt.s32.totalorder %s119, 5
      %s121 = scalar_select %p120, %s119, 5
      %s122 = smul.addr %s121, 8
      %s123 = scalar_lea.vmem %s0, %s122
      %p124 = pneg %p34
      %p125 = pneg %p31
      %p126 = pneg %p55
      %p127 = pneg %p52
      %p128 = pneg %p81
      %p129 = pneg %p78
      %s130 = smul.u32 3, %s13
      %p131 = scmp.lt.s32.totalorder %s130, 5
      %s132 = scalar_select %p131, %s130, 5
      %s133 = smul.addr %s132, 8
      %s134 = scalar_lea.vmem %s2, %s133
      %s135 = smul.u32 3, %s13
      %p136 = scmp.lt.s32.totalorder %s135, 5
      %s137 = scalar_select %p136, %s135, 5
      %s138 = smul.addr %s137, 8
      %s139 = scalar_lea.vmem %s0, %s138
      %s140 = smul.u32 3, %s13
      %s141 = smul.u32 3, %s13
      %p142 = scmp.lt.s32.totalorder %s141, 5
      %s143 = scalar_select %p142, %s141, 5
      %s144 = smul.addr %s143, 8
      %s145 = scalar_lea.vmem %s2, %s144
      %s146 = smul.u32 3, %s13
      %v147 = vld [vmem:[%s139] sm:$0xff]
      %v148 = vld [vmem:[%s139 + $0x8] sm:$0xff]
      %v149 = vld [vmem:[%s139 + $0x10] sm:$0xff]
      %v150 = vld [vmem:[%s1] sm:$0x1]
      %v151 = vld [vmem:[%s1 + $0x1] sm:$0x1]
      %v152 = vld [vmem:[%s1 + $0x2] sm:$0x1]
      %v153 = vld [vmem:[%s1 + $0x3] sm:$0x1]
      %v154 = vld [vmem:[%s1 + $0x8] sm:$0x7]
      %v155 = vld [vmem:[%s1 + $0x10] sm:$0xff]
      %v156 = vld [vmem:[%s1 + $0x18] sm:$0xf]
      %v157 = vld [vmem:[%s1 + $0x20] sm:$0xf]
      %v158 = vld [vmem:[%s1 + $0x28] sm:$0xff]
      %v159 = vld [vmem:[%s1 + $0x30] sm:$0xff]
      %vm160 = vcmask 64512
      %v161 = vsel %vm160, %v147, 0.0
      %162 = vadd.xlane.f32.xlu0 %v161
      %v163 = vpop.xlane.xlu0 %162
      %v164 = vsel %vm160, %v148, 0.0
      %165 = vadd.xlane.f32.xlu0 %v164
      %v166 = vpop.xlane.xlu0 %165
      %v167 = vsel %vm160, %v149, 0.0
      %168 = vadd.xlane.f32.xlu0 %v167
      %v169 = vpop.xlane.xlu0 %168
      %v170 = vrcp.pop 8.0
      %v171 = vmul.f32 %v163, %v170
      %v172 = vmul.f32 %v166, %v170
      %v173 = vmul.f32 %v169, %v170
      %v174 = vsub.f32 %v147, %v171
      %v175 = vsub.f32 %v148, %v172
      %v176 = vsub.f32 %v149, %v173
      %v177 = vmul.f32 %v174, %v174
      %v178 = vmul.f32 %v175, %v175
      %v179 = vmul.f32 %v176, %v176
      %v180 = vsel %vm160, %v177, 0.0
      %181 = vadd.xlane.f32.xlu0 %v180
      %v182 = vpop.xlane.xlu0 %181
      %v183 = vsel %vm160, %v178, 0.0
      %184 = vadd.xlane.f32.xlu0 %v183
      %v185 = vpop.xlane.xlu0 %184
      %v186 = vsel %vm160, %v179, 0.0
      %187 = vadd.xlane.f32.xlu0 %v186
      %v188 = vpop.xlane.xlu0 %187
      %v189 = vmul.f32 %v182, %v170
      %v190 = vmul.f32 %v185, %v170
      %v191 = vmul.f32 %v188, %v170
      %v192 = vadd.f32 %v189, 1e-05
      %v193 = vadd.f32 %v190, 1e-05
      %v194 = vadd.f32 %v191, 1e-05
      %v195 = vrsqrt.pop %v192
      %v196 = vrsqrt.pop %v193
      %v197 = vrsqrt.pop %v194
      %v198 = vmul.f32 %v174, %v195
      %v199 = vmul.f32 %v175, %v196
      %v200 = vmul.f32 %v176, %v197
      %v201 = vlaneseq
      %v202 = vshrl.u32 %v201, 7
      %v203 = vsub.s32 0, %v202
      %v204 = vrot.slane %v150, %v203
      %v205 = vmul.f32 %v198, %v204
      %v206 = vmul.f32 %v199, %v204
      %v207 = vmul.f32 %v200, %v204
      %v208 = vlaneseq
      %v209 = vshrl.u32 %v208, 7
      %v210 = vsub.s32 0, %v209
      %v211 = vrot.slane %v151, %v210
      %v212 = vadd.f32 %v205, %v211
      %v213 = vadd.f32 %v206, %v211
      %v214 = vadd.f32 %v207, %v211
      %v215 = vmul.f32 %v147, %v147
      %v216 = vmul.f32 %v148, %v148
      %v217 = vmul.f32 %v149, %v149
      %221 = vrot.lane.b32.xlu0 %v215, 125
      %v222 = vpop.permute.xlu0 %221
      %223 = vrot.lane.b32.xlu0 %v216, 125
      %v224 = vpop.permute.xlu0 %223
      %225 = vrot.lane.b32.xlu0 %v217, 125
      %v226 = vpop.permute.xlu0 %225
      %v230 = vadd.f32 %v215, %v222
      %v231 = vadd.f32 %v216, %v224
      %v232 = vadd.f32 %v217, %v226
      %233 = vrot.lane.b32.xlu0 %v215, 122
      %v234 = vpop.permute.xlu0 %233
      %235 = vrot.lane.b32.xlu0 %v216, 122
      %v236 = vpop.permute.xlu0 %235
      %237 = vrot.lane.b32.xlu0 %v217, 122
      %v238 = vpop.permute.xlu0 %237
      %v242 = vadd.f32 %v230, %v234
      %v243 = vadd.f32 %v231, %v236
      %v244 = vadd.f32 %v232, %v238
      %v245 = vmax.f32 %v242, 1e-08
      %v246 = vmax.f32 %v243, 1e-08
      %v247 = vmax.f32 %v244, 1e-08
      %251 = vrot.lane.b32.xlu0 %v245, 120
      %v252 = vpop.permute.xlu0 %251
      %253 = vrot.lane.b32.xlu0 %v246, 120
      %v254 = vpop.permute.xlu0 %253
      %255 = vrot.lane.b32.xlu0 %v247, 120
      %v256 = vpop.permute.xlu0 %255
      %vm260 = vcmask 23552
      %v261 = vsel %vm260, %v252, 0.0
      %262 = vadd.xlane.f32.xlu0 %v261
      %v263 = vpop.xlane.xlu0 %262
      %v264 = vsel %vm260, %v254, 0.0
      %265 = vadd.xlane.f32.xlu0 %v264
      %v266 = vpop.xlane.xlu0 %265
      %v267 = vsel %vm260, %v256, 0.0
      %268 = vadd.xlane.f32.xlu0 %v267
      %v269 = vpop.xlane.xlu0 %268
      %v270 = vrcp.pop 3.0
      %v271 = vmul.f32 %v263, %v270
      %v272 = vmul.f32 %v266, %v270
      %v273 = vmul.f32 %v269, %v270
      %v274 = vrsqrt.pop %v271
      %v275 = vrsqrt.pop %v272
      %v276 = vrsqrt.pop %v273
      %v277 = vmul.f32 %v147, %v274
      %v278 = vmul.f32 %v148, %v275
      %v279 = vmul.f32 %v149, %v276
      %283 = vrot.lane.b32.xlu0 %v277, 120
      %v284 = vpop.permute.xlu0 %283
      %285 = vrot.lane.b32.xlu0 %v278, 120
      %v286 = vpop.permute.xlu0 %285
      %287 = vrot.lane.b32.xlu0 %v279, 120
      %v288 = vpop.permute.xlu0 %287
      %v289 = vsel %vm260, %v284, 0
      %v291 = vsel %vm260, %v286, 0
      %v293 = vsel %vm260, %v288, 0
      %vm295 = vcmask 1042432
      %v297 = vsel %vm295, %v154, 0
      %299 = vmatprep.subr.mxu0 0.0
      %300 = vmatpush1.msra.mxu0 0.0
      %301 = vmatprep.subr.mxu0 0.0
      %302 = vmatpush1.msra.mxu0 0.0
      %303 = vmatprep.subr.mxu0 0.0
      %304 = vmatpush1.msra.mxu0 0.0
      %305 = vmatprep.subr.mxu0 0.0
      %306 = vmatpush1.msra.mxu0 0.0
      %307 = vmatprep.subr.mxu0 0.0
      %308 = vmatpush1.msra.mxu0 0.0
      %309 = vmatprep.subr.mxu0 0.0
      %310 = vmatpush1.msra.mxu0 0.0
      %311 = vmatprep.subr.mxu0 0.0
      %312 = vmatpush1.msra.mxu0 0.0
      %313 = vmatprep.subr.mxu0 0.0
      %314 = vmatpush1.msra.mxu0 0.0
      %315 = vmatprep.subr.mxu0 0.0
      %316 = vmatpush1.msra.mxu0 0.0
      %317 = vmatprep.subr.mxu0 0.0
      %318 = vmatpush1.msra.mxu0 0.0
      %319 = vmatprep.subr.mxu0 0.0
      %320 = vmatpush1.msra.mxu0 0.0
      %321 = vmatprep.subr.mxu0 0.0
      %322 = vmatpush1.msra.mxu0 0.0
      %323 = vmatprep.subr.mxu0 0.0
      %324 = vmatpush1.msra.mxu0 0.0
      %325 = vmatprep.subr.mxu0 0.0
      %326 = vmatpush1.msra.mxu0 0.0
      %327 = vmatprep.subr.mxu0 0.0
      %328 = vmatpush1.msra.mxu0 0.0
      %329 = vmatprep.subr.mxu0 0.0
      %330 = vmatpush1.msra.mxu0 %v297
      %331 = vmatprep.subr.mxu0 0.0
      %332 = vmatpush2.msra.mxu0 0.0
      %333 = vmatprep.subr.mxu0 0.0
      %334 = vmatpush2.msra.mxu0 0.0
      %335 = vmatprep.subr.mxu0 0.0
      %336 = vmatpush2.msra.mxu0 0.0
      %337 = vmatprep.subr.mxu0 0.0
      %338 = vmatpush2.msra.mxu0 0.0
      %339 = vmatprep.subr.mxu0 0.0
      %340 = vmatpush2.msra.mxu0 0.0
      %341 = vmatprep.subr.mxu0 0.0
      %342 = vmatpush2.msra.mxu0 0.0
      %343 = vmatprep.subr.mxu0 0.0
      %344 = vmatpush2.msra.mxu0 0.0
      %345 = vmatprep.subr.mxu0 0.0
      %346 = vmatpush2.msra.mxu0 0.0
      %347 = vmatprep.subr.mxu0 0.0
      %348 = vmatpush2.msra.mxu0 0.0
      %349 = vmatprep.subr.mxu0 0.0
      %350 = vmatpush2.msra.mxu0 0.0
      %351 = vmatprep.subr.mxu0 0.0
      %352 = vmatpush2.msra.mxu0 0.0
      %353 = vmatprep.subr.mxu0 0.0
      %354 = vmatpush2.msra.mxu0 0.0
      %355 = vmatprep.subr.mxu0 0.0
      %356 = vmatpush2.msra.mxu0 0.0
      %357 = vmatprep.subr.mxu0 0.0
      %358 = vmatpush2.msra.mxu0 0.0
      %359 = vmatprep.subr.mxu0 0.0
      %360 = vmatpush2.msra.mxu0 0.0
      %361 = vmatprep.subr.mxu0 0.0
      %362 = vmatpush2.msra.mxu0 0.0
      %363 = vmatprep.mubr.f32.mxu0 0.0
      %364 = vmatmul.mubr.f32.gmra.mxu0 %v289
      %v365 = vpop.f32.mrf.mxu0
      %v366 = vadd.f32 0.0, %v365
      %v367 = vpop.f32.mrf.mxu0
      %368 = vmatprep.mubr.f32.mxu0 0.0
      %369 = vmatmul.mubr.f32.gmra.mxu0 %v291
      %v370 = vpop.f32.mrf.mxu0
      %v371 = vadd.f32 0.0, %v370
      %v372 = vpop.f32.mrf.mxu0
      %373 = vmatprep.mubr.f32.mxu0 0.0
      %374 = vmatmul.mubr.f32.gmra.mxu0 %v293
      %v375 = vpop.f32.mrf.mxu0
      %v376 = vadd.f32 0.0, %v375
      %v377 = vpop.f32.mrf.mxu0
      %378 = vdwg.mxu0
      %379 = vrot.lane.b32.xlu0 %v277, 117
      %v380 = vpop.permute.xlu0 %379
      %381 = vrot.lane.b32.xlu0 %v278, 117
      %v382 = vpop.permute.xlu0 %381
      %383 = vrot.lane.b32.xlu0 %v279, 117
      %v384 = vpop.permute.xlu0 %383
      %v385 = vsel %vm260, %v380, 0
      %v387 = vsel %vm260, %v382, 0
      %v389 = vsel %vm260, %v384, 0
      %391 = vmatprep.subr.mxu0 0.0
      %392 = vmatpush1.msra.mxu0 0.0
      %393 = vmatprep.subr.mxu0 0.0
      %394 = vmatpush1.msra.mxu0 0.0
      %395 = vmatprep.subr.mxu0 0.0
      %396 = vmatpush1.msra.mxu0 0.0
      %397 = vmatprep.subr.mxu0 0.0
      %398 = vmatpush1.msra.mxu0 0.0
      %399 = vmatprep.subr.mxu0 0.0
      %400 = vmatpush1.msra.mxu0 0.0
      %401 = vmatprep.subr.mxu0 0.0
      %402 = vmatpush1.msra.mxu0 0.0
      %403 = vmatprep.subr.mxu0 0.0
      %404 = vmatpush1.msra.mxu0 0.0
      %405 = vmatprep.subr.mxu0 0.0
      %406 = vmatpush1.msra.mxu0 0.0
      %407 = vmatprep.subr.mxu0 0.0
      %408 = vmatpush1.msra.mxu0 0.0
      %409 = vmatprep.subr.mxu0 0.0
      %410 = vmatpush1.msra.mxu0 0.0
      %411 = vmatprep.subr.mxu0 0.0
      %412 = vmatpush1.msra.mxu0 0.0
      %413 = vmatprep.subr.mxu0 0.0
      %414 = vmatpush1.msra.mxu0 0.0
      %415 = vmatprep.subr.mxu0 0.0
      %416 = vmatpush1.msra.mxu0 0.0
      %417 = vmatprep.subr.mxu0 0.0
      %418 = vmatpush1.msra.mxu0 0.0
      %419 = vmatprep.subr.mxu0 0.0
      %420 = vmatpush1.msra.mxu0 0.0
      %421 = vmatprep.subr.mxu0 0.0
      %422 = vmatpush1.msra.mxu0 %v297
      %423 = vmatprep.subr.mxu0 0.0
      %424 = vmatpush2.msra.mxu0 0.0
      %425 = vmatprep.subr.mxu0 0.0
      %426 = vmatpush2.msra.mxu0 0.0
      %427 = vmatprep.subr.mxu0 0.0
      %428 = vmatpush2.msra.mxu0 0.0
      %429 = vmatprep.subr.mxu0 0.0
      %430 = vmatpush2.msra.mxu0 0.0
      %431 = vmatprep.subr.mxu0 0.0
      %432 = vmatpush2.msra.mxu0 0.0
      %433 = vmatprep.subr.mxu0 0.0
      %434 = vmatpush2.msra.mxu0 0.0
      %435 = vmatprep.subr.mxu0 0.0
      %436 = vmatpush2.msra.mxu0 0.0
      %437 = vmatprep.subr.mxu0 0.0
      %438 = vmatpush2.msra.mxu0 0.0
      %439 = vmatprep.subr.mxu0 0.0
      %440 = vmatpush2.msra.mxu0 0.0
      %441 = vmatprep.subr.mxu0 0.0
      %442 = vmatpush2.msra.mxu0 0.0
      %443 = vmatprep.subr.mxu0 0.0
      %444 = vmatpush2.msra.mxu0 0.0
      %445 = vmatprep.subr.mxu0 0.0
      %446 = vmatpush2.msra.mxu0 0.0
      %447 = vmatprep.subr.mxu0 0.0
      %448 = vmatpush2.msra.mxu0 0.0
      %449 = vmatprep.subr.mxu0 0.0
      %450 = vmatpush2.msra.mxu0 0.0
      %451 = vmatprep.subr.mxu0 0.0
      %452 = vmatpush2.msra.mxu0 0.0
      %453 = vmatprep.subr.mxu0 0.0
      %454 = vmatpush2.msra.mxu0 0.0
      %455 = vmatprep.mubr.f32.mxu0 0.0
      %456 = vmatmul.mubr.f32.gmra.mxu0 %v385
      %v457 = vpop.f32.mrf.mxu0
      %v458 = vadd.f32 0.0, %v457
      %v459 = vpop.f32.mrf.mxu0
      %460 = vmatprep.mubr.f32.mxu0 0.0
      %461 = vmatmul.mubr.f32.gmra.mxu0 %v387
      %v462 = vpop.f32.mrf.mxu0
      %v463 = vadd.f32 0.0, %v462
      %v464 = vpop.f32.mrf.mxu0
      %465 = vmatprep.mubr.f32.mxu0 0.0
      %466 = vmatmul.mubr.f32.gmra.mxu0 %v389
      %v467 = vpop.f32.mrf.mxu0
      %v468 = vadd.f32 0.0, %v467
      %v469 = vpop.f32.mrf.mxu0
      %470 = vdwg.mxu0
      %471 = vrot.lane.b32.xlu0 %v277, 114
      %v472 = vpop.permute.xlu0 %471
      %473 = vrot.lane.b32.xlu0 %v278, 114
      %v474 = vpop.permute.xlu0 %473
      %475 = vrot.lane.b32.xlu0 %v279, 114
      %v476 = vpop.permute.xlu0 %475
      %v477 = vsel %vm260, %v472, 0
      %v479 = vsel %vm260, %v474, 0
      %v481 = vsel %vm260, %v476, 0
      %483 = vmatprep.subr.mxu0 0.0
      %484 = vmatpush1.msra.mxu0 0.0
      %485 = vmatprep.subr.mxu0 0.0
      %486 = vmatpush1.msra.mxu0 0.0
      %487 = vmatprep.subr.mxu0 0.0
      %488 = vmatpush1.msra.mxu0 0.0
      %489 = vmatprep.subr.mxu0 0.0
      %490 = vmatpush1.msra.mxu0 0.0
      %491 = vmatprep.subr.mxu0 0.0
      %492 = vmatpush1.msra.mxu0 0.0
      %493 = vmatprep.subr.mxu0 0.0
      %494 = vmatpush1.msra.mxu0 0.0
      %495 = vmatprep.subr.mxu0 0.0
      %496 = vmatpush1.msra.mxu0 0.0
      %497 = vmatprep.subr.mxu0 0.0
      %498 = vmatpush1.msra.mxu0 0.0
      %499 = vmatprep.subr.mxu0 0.0
      %500 = vmatpush1.msra.mxu0 0.0
      %501 = vmatprep.subr.mxu0 0.0
      %502 = vmatpush1.msra.mxu0 0.0
      %503 = vmatprep.subr.mxu0 0.0
      %504 = vmatpush1.msra.mxu0 0.0
      %505 = vmatprep.subr.mxu0 0.0
      %506 = vmatpush1.msra.mxu0 0.0
      %507 = vmatprep.subr.mxu0 0.0
      %508 = vmatpush1.msra.mxu0 0.0
      %509 = vmatprep.subr.mxu0 0.0
      %510 = vmatpush1.msra.mxu0 0.0
      %511 = vmatprep.subr.mxu0 0.0
      %512 = vmatpush1.msra.mxu0 0.0
      %513 = vmatprep.subr.mxu0 0.0
      %514 = vmatpush1.msra.mxu0 %v297
      %515 = vmatprep.subr.mxu0 0.0
      %516 = vmatpush2.msra.mxu0 0.0
      %517 = vmatprep.subr.mxu0 0.0
      %518 = vmatpush2.msra.mxu0 0.0
      %519 = vmatprep.subr.mxu0 0.0
      %520 = vmatpush2.msra.mxu0 0.0
      %521 = vmatprep.subr.mxu0 0.0
      %522 = vmatpush2.msra.mxu0 0.0
      %523 = vmatprep.subr.mxu0 0.0
      %524 = vmatpush2.msra.mxu0 0.0
      %525 = vmatprep.subr.mxu0 0.0
      %526 = vmatpush2.msra.mxu0 0.0
      %527 = vmatprep.subr.mxu0 0.0
      %528 = vmatpush2.msra.mxu0 0.0
      %529 = vmatprep.subr.mxu0 0.0
      %530 = vmatpush2.msra.mxu0 0.0
      %531 = vmatprep.subr.mxu0 0.0
      %532 = vmatpush2.msra.mxu0 0.0
      %533 = vmatprep.subr.mxu0 0.0
      %534 = vmatpush2.msra.mxu0 0.0
      %535 = vmatprep.subr.mxu0 0.0
      %536 = vmatpush2.msra.mxu0 0.0
      %537 = vmatprep.subr.mxu0 0.0
      %538 = vmatpush2.msra.mxu0 0.0
      %539 = vmatprep.subr.mxu0 0.0
      %540 = vmatpush2.msra.mxu0 0.0
      %541 = vmatprep.subr.mxu0 0.0
      %542 = vmatpush2.msra.mxu0 0.0
      %543 = vmatprep.subr.mxu0 0.0
      %544 = vmatpush2.msra.mxu0 0.0
      %545 = vmatprep.subr.mxu0 0.0
      %546 = vmatpush2.msra.mxu0 0.0
      %547 = vmatprep.mubr.f32.mxu0 0.0
      %548 = vmatmul.mubr.f32.gmra.mxu0 %v477
      %v549 = vpop.f32.mrf.mxu0
      %v550 = vadd.f32 0.0, %v549
      %v551 = vpop.f32.mrf.mxu0
      %552 = vmatprep.mubr.f32.mxu0 0.0
      %553 = vmatmul.mubr.f32.gmra.mxu0 %v479
      %v554 = vpop.f32.mrf.mxu0
      %v555 = vadd.f32 0.0, %v554
      %v556 = vpop.f32.mrf.mxu0
      %557 = vmatprep.mubr.f32.mxu0 0.0
      %558 = vmatmul.mubr.f32.gmra.mxu0 %v481
      %v559 = vpop.f32.mrf.mxu0
      %v560 = vadd.f32 0.0, %v559
      %v561 = vpop.f32.mrf.mxu0
      %562 = vdwg.mxu0
      %v563 = vmul.f32 %v366, %v366
      %v564 = vmul.f32 %v371, %v371
      %v565 = vmul.f32 %v376, %v376
      %v566 = vmul.f32 %v458, %v458
      %v567 = vmul.f32 %v463, %v463
      %v568 = vmul.f32 %v468, %v468
      %v569 = vadd.f32 %v563, %v566
      %v570 = vadd.f32 %v564, %v567
      %v571 = vadd.f32 %v565, %v568
      %v572 = vmul.f32 %v550, %v550
      %v573 = vmul.f32 %v555, %v555
      %v574 = vmul.f32 %v560, %v560
      %v575 = vadd.f32 %v569, %v572
      %v576 = vadd.f32 %v570, %v573
      %v577 = vadd.f32 %v571, %v574
      %v578 = vmax.f32 %v575, 1e-08
      %v579 = vmax.f32 %v576, 1e-08
      %v580 = vmax.f32 %v577, 1e-08
      %v581 = vrsqrt.pop %v578
      %v582 = vmul.f32 %v578, %v581
      %vm583 = vcmp.eq.f32.partialorder %v578, inf
      %v584 = vsel %vm583, %v578, %v582
      %vm585 = vcmp.eq.f32.partialorder %v578, 0.0
      %v586 = vand.u32 %v578, 2147483648
      %v587 = vsel %vm585, %v586, %v584
      %v588 = vrsqrt.pop %v579
      %v589 = vmul.f32 %v579, %v588
      %vm590 = vcmp.eq.f32.partialorder %v579, inf
      %v591 = vsel %vm590, %v579, %v589
      %vm592 = vcmp.eq.f32.partialorder %v579, 0.0
      %v593 = vand.u32 %v579, 2147483648
      %v594 = vsel %vm592, %v593, %v591
      %v595 = vrsqrt.pop %v580
      %v596 = vmul.f32 %v580, %v595
      %vm597 = vcmp.eq.f32.partialorder %v580, inf
      %v598 = vsel %vm597, %v580, %v596
      %vm599 = vcmp.eq.f32.partialorder %v580, 0.0
      %v600 = vand.u32 %v580, 2147483648
      %v601 = vsel %vm599, %v600, %v598
      %vm602 = vcmask 31744
      %v604 = vsel %vm602, %v587, 0
      %v607 = vsel %vm602, %v594, 0
      %v610 = vsel %vm602, %v601, 0
      %vm612 = vcmask 1043456
      %v614 = vsel %vm612, %v156, 0
      %616 = vmatprep.subr.mxu0 0.0
      %617 = vmatpush1.msra.mxu0 0.0
      %618 = vmatprep.subr.mxu0 0.0
      %619 = vmatpush1.msra.mxu0 0.0
      %620 = vmatprep.subr.mxu0 0.0
      %621 = vmatpush1.msra.mxu0 0.0
      %622 = vmatprep.subr.mxu0 0.0
      %623 = vmatpush1.msra.mxu0 0.0
      %624 = vmatprep.subr.mxu0 0.0
      %625 = vmatpush1.msra.mxu0 0.0
      %626 = vmatprep.subr.mxu0 0.0
      %627 = vmatpush1.msra.mxu0 0.0
      %628 = vmatprep.subr.mxu0 0.0
      %629 = vmatpush1.msra.mxu0 0.0
      %630 = vmatprep.subr.mxu0 0.0
      %631 = vmatpush1.msra.mxu0 0.0
      %632 = vmatprep.subr.mxu0 0.0
      %633 = vmatpush1.msra.mxu0 0.0
      %634 = vmatprep.subr.mxu0 0.0
      %635 = vmatpush1.msra.mxu0 0.0
      %636 = vmatprep.subr.mxu0 0.0
      %637 = vmatpush1.msra.mxu0 0.0
      %638 = vmatprep.subr.mxu0 0.0
      %639 = vmatpush1.msra.mxu0 0.0
      %640 = vmatprep.subr.mxu0 0.0
      %641 = vmatpush1.msra.mxu0 0.0
      %642 = vmatprep.subr.mxu0 0.0
      %643 = vmatpush1.msra.mxu0 0.0
      %644 = vmatprep.subr.mxu0 0.0
      %645 = vmatpush1.msra.mxu0 0.0
      %646 = vmatprep.subr.mxu0 0.0
      %647 = vmatpush1.msra.mxu0 %v614
      %648 = vmatprep.subr.mxu0 0.0
      %649 = vmatpush2.msra.mxu0 0.0
      %650 = vmatprep.subr.mxu0 0.0
      %651 = vmatpush2.msra.mxu0 0.0
      %652 = vmatprep.subr.mxu0 0.0
      %653 = vmatpush2.msra.mxu0 0.0
      %654 = vmatprep.subr.mxu0 0.0
      %655 = vmatpush2.msra.mxu0 0.0
      %656 = vmatprep.subr.mxu0 0.0
      %657 = vmatpush2.msra.mxu0 0.0
      %658 = vmatprep.subr.mxu0 0.0
      %659 = vmatpush2.msra.mxu0 0.0
      %660 = vmatprep.subr.mxu0 0.0
      %661 = vmatpush2.msra.mxu0 0.0
      %662 = vmatprep.subr.mxu0 0.0
      %663 = vmatpush2.msra.mxu0 0.0
      %664 = vmatprep.subr.mxu0 0.0
      %665 = vmatpush2.msra.mxu0 0.0
      %666 = vmatprep.subr.mxu0 0.0
      %667 = vmatpush2.msra.mxu0 0.0
      %668 = vmatprep.subr.mxu0 0.0
      %669 = vmatpush2.msra.mxu0 0.0
      %670 = vmatprep.subr.mxu0 0.0
      %671 = vmatpush2.msra.mxu0 0.0
      %672 = vmatprep.subr.mxu0 0.0
      %673 = vmatpush2.msra.mxu0 0.0
      %674 = vmatprep.subr.mxu0 0.0
      %675 = vmatpush2.msra.mxu0 0.0
      %676 = vmatprep.subr.mxu0 0.0
      %677 = vmatpush2.msra.mxu0 0.0
      %678 = vmatprep.subr.mxu0 0.0
      %679 = vmatpush2.msra.mxu0 0.0
      %680 = vmatprep.mubr.f32.mxu0 0.0
      %681 = vmatmul.mubr.f32.gmra.mxu0 %v604
      %v682 = vpop.f32.mrf.mxu0
      %v683 = vadd.f32 0.0, %v682
      %v684 = vpop.f32.mrf.mxu0
      %685 = vmatprep.mubr.f32.mxu0 0.0
      %686 = vmatmul.mubr.f32.gmra.mxu0 %v607
      %v687 = vpop.f32.mrf.mxu0
      %v688 = vadd.f32 0.0, %v687
      %v689 = vpop.f32.mrf.mxu0
      %690 = vmatprep.mubr.f32.mxu0 0.0
      %691 = vmatmul.mubr.f32.gmra.mxu0 %v610
      %v692 = vpop.f32.mrf.mxu0
      %v693 = vadd.f32 0.0, %v692
      %v694 = vpop.f32.mrf.mxu0
      %695 = vdwg.mxu0
      %v697 = vsel %vm160, %v212, 0
      %v700 = vsel %vm160, %v213, 0
      %v703 = vsel %vm160, %v214, 0
      %705 = vmatprep.subr.mxu0 0.0
      %706 = vmatpush1.msra.mxu0 0.0
      %707 = vmatprep.subr.mxu0 0.0
      %708 = vmatpush1.msra.mxu0 0.0
      %709 = vmatprep.subr.mxu0 0.0
      %710 = vmatpush1.msra.mxu0 0.0
      %711 = vmatprep.subr.mxu0 0.0
      %712 = vmatpush1.msra.mxu0 0.0
      %713 = vmatprep.subr.mxu0 0.0
      %714 = vmatpush1.msra.mxu0 0.0
      %715 = vmatprep.subr.mxu0 0.0
      %716 = vmatpush1.msra.mxu0 0.0
      %717 = vmatprep.subr.mxu0 0.0
      %718 = vmatpush1.msra.mxu0 0.0
      %719 = vmatprep.subr.mxu0 0.0
      %720 = vmatpush1.msra.mxu0 0.0
      %721 = vmatprep.subr.mxu0 0.0
      %722 = vmatpush1.msra.mxu0 0.0
      %723 = vmatprep.subr.mxu0 0.0
      %724 = vmatpush1.msra.mxu0 0.0
      %725 = vmatprep.subr.mxu0 0.0
      %726 = vmatpush1.msra.mxu0 0.0
      %727 = vmatprep.subr.mxu0 0.0
      %728 = vmatpush1.msra.mxu0 0.0
      %729 = vmatprep.subr.mxu0 0.0
      %730 = vmatpush1.msra.mxu0 0.0
      %731 = vmatprep.subr.mxu0 0.0
      %732 = vmatpush1.msra.mxu0 0.0
      %733 = vmatprep.subr.mxu0 0.0
      %734 = vmatpush1.msra.mxu0 0.0
      %735 = vmatprep.subr.mxu0 0.0
      %736 = vmatpush1.msra.mxu0 %v155
      %737 = vmatprep.subr.mxu0 0.0
      %738 = vmatpush2.msra.mxu0 0.0
      %739 = vmatprep.subr.mxu0 0.0
      %740 = vmatpush2.msra.mxu0 0.0
      %741 = vmatprep.subr.mxu0 0.0
      %742 = vmatpush2.msra.mxu0 0.0
      %743 = vmatprep.subr.mxu0 0.0
      %744 = vmatpush2.msra.mxu0 0.0
      %745 = vmatprep.subr.mxu0 0.0
      %746 = vmatpush2.msra.mxu0 0.0
      %747 = vmatprep.subr.mxu0 0.0
      %748 = vmatpush2.msra.mxu0 0.0
      %749 = vmatprep.subr.mxu0 0.0
      %750 = vmatpush2.msra.mxu0 0.0
      %751 = vmatprep.subr.mxu0 0.0
      %752 = vmatpush2.msra.mxu0 0.0
      %753 = vmatprep.subr.mxu0 0.0
      %754 = vmatpush2.msra.mxu0 0.0
      %755 = vmatprep.subr.mxu0 0.0
      %756 = vmatpush2.msra.mxu0 0.0
      %757 = vmatprep.subr.mxu0 0.0
      %758 = vmatpush2.msra.mxu0 0.0
      %759 = vmatprep.subr.mxu0 0.0
      %760 = vmatpush2.msra.mxu0 0.0
      %761 = vmatprep.subr.mxu0 0.0
      %762 = vmatpush2.msra.mxu0 0.0
      %763 = vmatprep.subr.mxu0 0.0
      %764 = vmatpush2.msra.mxu0 0.0
      %765 = vmatprep.subr.mxu0 0.0
      %766 = vmatpush2.msra.mxu0 0.0
      %767 = vmatprep.subr.mxu0 0.0
      %768 = vmatpush2.msra.mxu0 0.0
      %769 = vmatprep.mubr.f32.mxu0 0.0
      %770 = vmatmul.mubr.f32.gmra.mxu0 %v697
      %v771 = vpop.f32.mrf.mxu0
      %v772 = vadd.f32 %v683, %v771
      %v773 = vpop.f32.mrf.mxu0
      %774 = vmatprep.mubr.f32.mxu0 0.0
      %775 = vmatmul.mubr.f32.gmra.mxu0 %v700
      %v776 = vpop.f32.mrf.mxu0
      %v777 = vadd.f32 %v688, %v776
      %v778 = vpop.f32.mrf.mxu0
      %779 = vmatprep.mubr.f32.mxu0 0.0
      %780 = vmatmul.mubr.f32.gmra.mxu0 %v703
      %v781 = vpop.f32.mrf.mxu0
      %v782 = vadd.f32 %v693, %v781
      %v783 = vpop.f32.mrf.mxu0
      %784 = vdwg.mxu0
      %v785 = vlaneseq
      %v786 = vshrl.u32 %v785, 7
      %v787 = vsub.s32 0, %v786
      %v788 = vrot.slane %v152, %v787
      %v789 = vadd.f32 %v772, %v788
      %v790 = vadd.f32 %v777, %v788
      %v791 = vadd.f32 %v782, %v788
      %v792 = vlaneseq
      %v793 = vshrl.u32 %v792, 7
      %v794 = vsub.s32 0, %v793
      %v795 = vrot.slane %v153, %v794
      %vm796 = vcmask 130048
      %v798 = vsel %vm796, %v789, 0
      %v801 = vsel %vm796, %v790, 0
      %v804 = vsel %vm796, %v791, 0
      %806 = vmatprep.subr.mxu0 0.0
      %807 = vmatpush1.msra.mxu0 0.0
      %808 = vmatprep.subr.mxu0 0.0
      %809 = vmatpush1.msra.mxu0 0.0
      %810 = vmatprep.subr.mxu0 0.0
      %811 = vmatpush1.msra.mxu0 0.0
      %812 = vmatprep.subr.mxu0 0.0
      %813 = vmatpush1.msra.mxu0 0.0
      %814 = vmatprep.subr.mxu0 0.0
      %815 = vmatpush1.msra.mxu0 0.0
      %816 = vmatprep.subr.mxu0 0.0
      %817 = vmatpush1.msra.mxu0 0.0
      %818 = vmatprep.subr.mxu0 0.0
      %819 = vmatpush1.msra.mxu0 0.0
      %820 = vmatprep.subr.mxu0 0.0
      %821 = vmatpush1.msra.mxu0 0.0
      %822 = vmatprep.subr.mxu0 0.0
      %823 = vmatpush1.msra.mxu0 0.0
      %824 = vmatprep.subr.mxu0 0.0
      %825 = vmatpush1.msra.mxu0 0.0
      %826 = vmatprep.subr.mxu0 0.0
      %827 = vmatpush1.msra.mxu0 0.0
      %828 = vmatprep.subr.mxu0 0.0
      %829 = vmatpush1.msra.mxu0 0.0
      %830 = vmatprep.subr.mxu0 0.0
      %831 = vmatpush1.msra.mxu0 0.0
      %832 = vmatprep.subr.mxu0 0.0
      %833 = vmatpush1.msra.mxu0 0.0
      %834 = vmatprep.subr.mxu0 0.0
      %835 = vmatpush1.msra.mxu0 %v159
      %836 = vmatprep.subr.mxu0 0.0
      %837 = vmatpush1.msra.mxu0 %v158
      %838 = vmatprep.subr.mxu0 0.0
      %839 = vmatpush2.msra.mxu0 0.0
      %840 = vmatprep.subr.mxu0 0.0
      %841 = vmatpush2.msra.mxu0 0.0
      %842 = vmatprep.subr.mxu0 0.0
      %843 = vmatpush2.msra.mxu0 0.0
      %844 = vmatprep.subr.mxu0 0.0
      %845 = vmatpush2.msra.mxu0 0.0
      %846 = vmatprep.subr.mxu0 0.0
      %847 = vmatpush2.msra.mxu0 0.0
      %848 = vmatprep.subr.mxu0 0.0
      %849 = vmatpush2.msra.mxu0 0.0
      %850 = vmatprep.subr.mxu0 0.0
      %851 = vmatpush2.msra.mxu0 0.0
      %852 = vmatprep.subr.mxu0 0.0
      %853 = vmatpush2.msra.mxu0 0.0
      %854 = vmatprep.subr.mxu0 0.0
      %855 = vmatpush2.msra.mxu0 0.0
      %856 = vmatprep.subr.mxu0 0.0
      %857 = vmatpush2.msra.mxu0 0.0
      %858 = vmatprep.subr.mxu0 0.0
      %859 = vmatpush2.msra.mxu0 0.0
      %860 = vmatprep.subr.mxu0 0.0
      %861 = vmatpush2.msra.mxu0 0.0
      %862 = vmatprep.subr.mxu0 0.0
      %863 = vmatpush2.msra.mxu0 0.0
      %864 = vmatprep.subr.mxu0 0.0
      %865 = vmatpush2.msra.mxu0 0.0
      %866 = vmatprep.subr.mxu0 0.0
      %867 = vmatpush2.msra.mxu0 0.0
      %868 = vmatprep.subr.mxu0 0.0
      %869 = vmatpush2.msra.mxu0 0.0
      %870 = vmatprep.mubr.f32.mxu0 0.0
      %871 = vmatmul.mubr.f32.gmra.mxu0 %v798
      %v872 = vpop.f32.mrf.mxu0
      %v873 = vadd.f32 %v795, %v872
      %v874 = vpop.f32.mrf.mxu0
      %875 = vmatprep.mubr.f32.mxu0 0.0
      %876 = vmatmul.mubr.f32.gmra.mxu0 %v801
      %v877 = vpop.f32.mrf.mxu0
      %v878 = vadd.f32 %v795, %v877
      %v879 = vpop.f32.mrf.mxu0
      %880 = vmatprep.mubr.f32.mxu0 0.0
      %881 = vmatmul.mubr.f32.gmra.mxu0 %v804
      %v882 = vpop.f32.mrf.mxu0
      %v883 = vadd.f32 %v795, %v882
      %v884 = vpop.f32.mrf.mxu0
      %885 = vdwg.mxu0
      %v886 = vxor.u32 %v873, 2147483648
      %v887 = vxor.u32 %v878, 2147483648
      %v888 = vxor.u32 %v883, 2147483648
      %v889 = vmul.f32 %v886, 1.442695
      %v890 = vpow.pop %v889
      %v891 = vmul.f32 %v887, 1.442695
      %v892 = vpow.pop %v891
      %v893 = vmul.f32 %v888, 1.442695
      %v894 = vpow.pop %v893
      %v895 = vadd.f32 %v890, 1.0
      %v896 = vadd.f32 %v892, 1.0
      %v897 = vadd.f32 %v894, 1.0
      %v898 = vrcp.pop %v895
      %v899 = vmul.f32 1.0, %v898
      %v900 = vrcp.pop %v896
      %v901 = vmul.f32 1.0, %v900
      %v902 = vrcp.pop %v897
      %v903 = vmul.f32 1.0, %v902
      %v905 = vsel %vm602, %v366, 0
      %v908 = vsel %vm602, %v371, 0
      %v911 = vsel %vm602, %v376, 0
      %v914 = vsel %vm612, %v157, 0
      %916 = vmatprep.subr.mxu0 0.0
      %917 = vmatpush1.msra.mxu0 0.0
      %918 = vmatprep.subr.mxu0 0.0
      %919 = vmatpush1.msra.mxu0 0.0
      %920 = vmatprep.subr.mxu0 0.0
      %921 = vmatpush1.msra.mxu0 0.0
      %922 = vmatprep.subr.mxu0 0.0
      %923 = vmatpush1.msra.mxu0 0.0
      %924 = vmatprep.subr.mxu0 0.0
      %925 = vmatpush1.msra.mxu0 0.0
      %926 = vmatprep.subr.mxu0 0.0
      %927 = vmatpush1.msra.mxu0 0.0
      %928 = vmatprep.subr.mxu0 0.0
      %929 = vmatpush1.msra.mxu0 0.0
      %930 = vmatprep.subr.mxu0 0.0
      %931 = vmatpush1.msra.mxu0 0.0
      %932 = vmatprep.subr.mxu0 0.0
      %933 = vmatpush1.msra.mxu0 0.0
      %934 = vmatprep.subr.mxu0 0.0
      %935 = vmatpush1.msra.mxu0 0.0
      %936 = vmatprep.subr.mxu0 0.0
      %937 = vmatpush1.msra.mxu0 0.0
      %938 = vmatprep.subr.mxu0 0.0
      %939 = vmatpush1.msra.mxu0 0.0
      %940 = vmatprep.subr.mxu0 0.0
      %941 = vmatpush1.msra.mxu0 0.0
      %942 = vmatprep.subr.mxu0 0.0
      %943 = vmatpush1.msra.mxu0 0.0
      %944 = vmatprep.subr.mxu0 0.0
      %945 = vmatpush1.msra.mxu0 0.0
      %946 = vmatprep.subr.mxu0 0.0
      %947 = vmatpush1.msra.mxu0 %v914
      %948 = vmatprep.subr.mxu0 0.0
      %949 = vmatpush2.msra.mxu0 0.0
      %950 = vmatprep.subr.mxu0 0.0
      %951 = vmatpush2.msra.mxu0 0.0
      %952 = vmatprep.subr.mxu0 0.0
      %953 = vmatpush2.msra.mxu0 0.0
      %954 = vmatprep.subr.mxu0 0.0
      %955 = vmatpush2.msra.mxu0 0.0
      %956 = vmatprep.subr.mxu0 0.0
      %957 = vmatpush2.msra.mxu0 0.0
      %958 = vmatprep.subr.mxu0 0.0
      %959 = vmatpush2.msra.mxu0 0.0
      %960 = vmatprep.subr.mxu0 0.0
      %961 = vmatpush2.msra.mxu0 0.0
      %962 = vmatprep.subr.mxu0 0.0
      %963 = vmatpush2.msra.mxu0 0.0
      %964 = vmatprep.subr.mxu0 0.0
      %965 = vmatpush2.msra.mxu0 0.0
      %966 = vmatprep.subr.mxu0 0.0
      %967 = vmatpush2.msra.mxu0 0.0
      %968 = vmatprep.subr.mxu0 0.0
      %969 = vmatpush2.msra.mxu0 0.0
      %970 = vmatprep.subr.mxu0 0.0
      %971 = vmatpush2.msra.mxu0 0.0
      %972 = vmatprep.subr.mxu0 0.0
      %973 = vmatpush2.msra.mxu0 0.0
      %974 = vmatprep.subr.mxu0 0.0
      %975 = vmatpush2.msra.mxu0 0.0
      %976 = vmatprep.subr.mxu0 0.0
      %977 = vmatpush2.msra.mxu0 0.0
      %978 = vmatprep.subr.mxu0 0.0
      %979 = vmatpush2.msra.mxu0 0.0
      %980 = vmatprep.mubr.f32.mxu0 0.0
      %981 = vmatmul.mubr.f32.gmra.mxu0 %v905
      %v982 = vpop.f32.mrf.mxu0
      %v983 = vadd.f32 0.0, %v982
      %v984 = vpop.f32.mrf.mxu0
      %985 = vmatprep.mubr.f32.mxu0 0.0
      %986 = vmatmul.mubr.f32.gmra.mxu0 %v908
      %v987 = vpop.f32.mrf.mxu0
      %v988 = vadd.f32 0.0, %v987
      %v989 = vpop.f32.mrf.mxu0
      %990 = vmatprep.mubr.f32.mxu0 0.0
      %991 = vmatmul.mubr.f32.gmra.mxu0 %v911
      %v992 = vpop.f32.mrf.mxu0
      %v993 = vadd.f32 0.0, %v992
      %v994 = vpop.f32.mrf.mxu0
      %995 = vdwg.mxu0
      %v996 = vmul.f32 %v983, %v899
      %v997 = vmul.f32 %v988, %v901
      %v998 = vmul.f32 %v993, %v903
      %v1000 = vsel %vm602, %v458, 0
      %v1003 = vsel %vm602, %v463, 0
      %v1006 = vsel %vm602, %v468, 0
      %1008 = vmatprep.subr.mxu0 0.0
      %1009 = vmatpush1.msra.mxu0 0.0
      %1010 = vmatprep.subr.mxu0 0.0
      %1011 = vmatpush1.msra.mxu0 0.0
      %1012 = vmatprep.subr.mxu0 0.0
      %1013 = vmatpush1.msra.mxu0 0.0
      %1014 = vmatprep.subr.mxu0 0.0
      %1015 = vmatpush1.msra.mxu0 0.0
      %1016 = vmatprep.subr.mxu0 0.0
      %1017 = vmatpush1.msra.mxu0 0.0
      %1018 = vmatprep.subr.mxu0 0.0
      %1019 = vmatpush1.msra.mxu0 0.0
      %1020 = vmatprep.subr.mxu0 0.0
      %1021 = vmatpush1.msra.mxu0 0.0
      %1022 = vmatprep.subr.mxu0 0.0
      %1023 = vmatpush1.msra.mxu0 0.0
      %1024 = vmatprep.subr.mxu0 0.0
      %1025 = vmatpush1.msra.mxu0 0.0
      %1026 = vmatprep.subr.mxu0 0.0
      %1027 = vmatpush1.msra.mxu0 0.0
      %1028 = vmatprep.subr.mxu0 0.0
      %1029 = vmatpush1.msra.mxu0 0.0
      %1030 = vmatprep.subr.mxu0 0.0
      %1031 = vmatpush1.msra.mxu0 0.0
      %1032 = vmatprep.subr.mxu0 0.0
      %1033 = vmatpush1.msra.mxu0 0.0
      %1034 = vmatprep.subr.mxu0 0.0
      %1035 = vmatpush1.msra.mxu0 0.0
      %1036 = vmatprep.subr.mxu0 0.0
      %1037 = vmatpush1.msra.mxu0 0.0
      %1038 = vmatprep.subr.mxu0 0.0
      %1039 = vmatpush1.msra.mxu0 %v914
      %1040 = vmatprep.subr.mxu0 0.0
      %1041 = vmatpush2.msra.mxu0 0.0
      %1042 = vmatprep.subr.mxu0 0.0
      %1043 = vmatpush2.msra.mxu0 0.0
      %1044 = vmatprep.subr.mxu0 0.0
      %1045 = vmatpush2.msra.mxu0 0.0
      %1046 = vmatprep.subr.mxu0 0.0
      %1047 = vmatpush2.msra.mxu0 0.0
      %1048 = vmatprep.subr.mxu0 0.0
      %1049 = vmatpush2.msra.mxu0 0.0
      %1050 = vmatprep.subr.mxu0 0.0
      %1051 = vmatpush2.msra.mxu0 0.0
      %1052 = vmatprep.subr.mxu0 0.0
      %1053 = vmatpush2.msra.mxu0 0.0
      %1054 = vmatprep.subr.mxu0 0.0
      %1055 = vmatpush2.msra.mxu0 0.0
      %1056 = vmatprep.subr.mxu0 0.0
      %1057 = vmatpush2.msra.mxu0 0.0
      %1058 = vmatprep.subr.mxu0 0.0
      %1059 = vmatpush2.msra.mxu0 0.0
      %1060 = vmatprep.subr.mxu0 0.0
      %1061 = vmatpush2.msra.mxu0 0.0
      %1062 = vmatprep.subr.mxu0 0.0
      %1063 = vmatpush2.msra.mxu0 0.0
      %1064 = vmatprep.subr.mxu0 0.0
      %1065 = vmatpush2.msra.mxu0 0.0
      %1066 = vmatprep.subr.mxu0 0.0
      %1067 = vmatpush2.msra.mxu0 0.0
      %1068 = vmatprep.subr.mxu0 0.0
      %1069 = vmatpush2.msra.mxu0 0.0
      %1070 = vmatprep.subr.mxu0 0.0
      %1071 = vmatpush2.msra.mxu0 0.0
      %1072 = vmatprep.mubr.f32.mxu0 0.0
      %1073 = vmatmul.mubr.f32.gmra.mxu0 %v1000
      %v1074 = vpop.f32.mrf.mxu0
      %v1075 = vadd.f32 0.0, %v1074
      %v1076 = vpop.f32.mrf.mxu0
      %1077 = vmatprep.mubr.f32.mxu0 0.0
      %1078 = vmatmul.mubr.f32.gmra.mxu0 %v1003
      %v1079 = vpop.f32.mrf.mxu0
      %v1080 = vadd.f32 0.0, %v1079
      %v1081 = vpop.f32.mrf.mxu0
      %1082 = vmatprep.mubr.f32.mxu0 0.0
      %1083 = vmatmul.mubr.f32.gmra.mxu0 %v1006
      %v1084 = vpop.f32.mrf.mxu0
      %v1085 = vadd.f32 0.0, %v1084
      %v1086 = vpop.f32.mrf.mxu0
      %1087 = vdwg.mxu0
      %v1088 = vmul.f32 %v1075, %v899
      %v1089 = vmul.f32 %v1080, %v901
      %v1090 = vmul.f32 %v1085, %v903
      %v1092 = vsel %vm602, %v550, 0
      %v1095 = vsel %vm602, %v555, 0
      %v1098 = vsel %vm602, %v560, 0
      %1100 = vmatprep.subr.mxu0 0.0
      %1101 = vmatpush1.msra.mxu0 0.0
      %1102 = vmatprep.subr.mxu0 0.0
      %1103 = vmatpush1.msra.mxu0 0.0
      %1104 = vmatprep.subr.mxu0 0.0
      %1105 = vmatpush1.msra.mxu0 0.0
      %1106 = vmatprep.subr.mxu0 0.0
      %1107 = vmatpush1.msra.mxu0 0.0
      %1108 = vmatprep.subr.mxu0 0.0
      %1109 = vmatpush1.msra.mxu0 0.0
      %1110 = vmatprep.subr.mxu0 0.0
      %1111 = vmatpush1.msra.mxu0 0.0
      %1112 = vmatprep.subr.mxu0 0.0
      %1113 = vmatpush1.msra.mxu0 0.0
      %1114 = vmatprep.subr.mxu0 0.0
      %1115 = vmatpush1.msra.mxu0 0.0
      %1116 = vmatprep.subr.mxu0 0.0
      %1117 = vmatpush1.msra.mxu0 0.0
      %1118 = vmatprep.subr.mxu0 0.0
      %1119 = vmatpush1.msra.mxu0 0.0
      %1120 = vmatprep.subr.mxu0 0.0
      %1121 = vmatpush1.msra.mxu0 0.0
      %1122 = vmatprep.subr.mxu0 0.0
      %1123 = vmatpush1.msra.mxu0 0.0
      %1124 = vmatprep.subr.mxu0 0.0
      %1125 = vmatpush1.msra.mxu0 0.0
      %1126 = vmatprep.subr.mxu0 0.0
      %1127 = vmatpush1.msra.mxu0 0.0
      %1128 = vmatprep.subr.mxu0 0.0
      %1129 = vmatpush1.msra.mxu0 0.0
      %1130 = vmatprep.subr.mxu0 0.0
      %1131 = vmatpush1.msra.mxu0 %v914
      %1132 = vmatprep.subr.mxu0 0.0
      %1133 = vmatpush2.msra.mxu0 0.0
      %1134 = vmatprep.subr.mxu0 0.0
      %1135 = vmatpush2.msra.mxu0 0.0
      %1136 = vmatprep.subr.mxu0 0.0
      %1137 = vmatpush2.msra.mxu0 0.0
      %1138 = vmatprep.subr.mxu0 0.0
      %1139 = vmatpush2.msra.mxu0 0.0
      %1140 = vmatprep.subr.mxu0 0.0
      %1141 = vmatpush2.msra.mxu0 0.0
      %1142 = vmatprep.subr.mxu0 0.0
      %1143 = vmatpush2.msra.mxu0 0.0
      %1144 = vmatprep.subr.mxu0 0.0
      %1145 = vmatpush2.msra.mxu0 0.0
      %1146 = vmatprep.subr.mxu0 0.0
      %1147 = vmatpush2.msra.mxu0 0.0
      %1148 = vmatprep.subr.mxu0 0.0
      %1149 = vmatpush2.msra.mxu0 0.0
      %1150 = vmatprep.subr.mxu0 0.0
      %1151 = vmatpush2.msra.mxu0 0.0
      %1152 = vmatprep.subr.mxu0 0.0
      %1153 = vmatpush2.msra.mxu0 0.0
      %1154 = vmatprep.subr.mxu0 0.0
      %1155 = vmatpush2.msra.mxu0 0.0
      %1156 = vmatprep.subr.mxu0 0.0
      %1157 = vmatpush2.msra.mxu0 0.0
      %1158 = vmatprep.subr.mxu0 0.0
      %1159 = vmatpush2.msra.mxu0 0.0
      %1160 = vmatprep.subr.mxu0 0.0
      %1161 = vmatpush2.msra.mxu0 0.0
      %1162 = vmatprep.subr.mxu0 0.0
      %1163 = vmatpush2.msra.mxu0 0.0
      %1164 = vmatprep.mubr.f32.mxu0 0.0
      %1165 = vmatmul.mubr.f32.gmra.mxu0 %v1092
      %v1166 = vpop.f32.mrf.mxu0
      %v1167 = vadd.f32 0.0, %v1166
      %v1168 = vpop.f32.mrf.mxu0
      %1169 = vmatprep.mubr.f32.mxu0 0.0
      %1170 = vmatmul.mubr.f32.gmra.mxu0 %v1095
      %v1171 = vpop.f32.mrf.mxu0
      %v1172 = vadd.f32 0.0, %v1171
      %v1173 = vpop.f32.mrf.mxu0
      %1174 = vmatprep.mubr.f32.mxu0 0.0
      %1175 = vmatmul.mubr.f32.gmra.mxu0 %v1098
      %v1176 = vpop.f32.mrf.mxu0
      %v1177 = vadd.f32 0.0, %v1176
      %v1178 = vpop.f32.mrf.mxu0
      %1179 = vdwg.mxu0
      %v1180 = vmul.f32 %v1167, %v899
      %v1181 = vmul.f32 %v1172, %v901
      %v1182 = vmul.f32 %v1177, %v903
      %1183 = vst.msk [vmem:[%s145] sm:$0xff] %vm796, %v789
      %1184 = vst.msk [vmem:[%s145 + $0x8] sm:$0xff] %vm796, %v790
      %1185 = vst.msk [vmem:[%s145 + $0x10] sm:$0xff] %vm796, %v791
      %1189 = vrot.lane.b32.xlu0 %v996, 16
      %v1190 = vpop.permute.xlu0 %1189
      %1191 = vrot.lane.b32.xlu0 %v997, 16
      %v1192 = vpop.permute.xlu0 %1191
      %1193 = vrot.lane.b32.xlu0 %v998, 16
      %v1194 = vpop.permute.xlu0 %1193
      %vm1198 = vcmask 162944
      %1199 = vst.msk [vmem:[%s145] sm:$0xff] %vm1198, %v1190
      %1200 = vst.msk [vmem:[%s145 + $0x8] sm:$0xff] %vm1198, %v1192
      %1201 = vst.msk [vmem:[%s145 + $0x10] sm:$0xff] %vm1198, %v1194
      %1205 = vrot.lane.b32.xlu0 %v1088, 20
      %v1206 = vpop.permute.xlu0 %1205
      %1207 = vrot.lane.b32.xlu0 %v1089, 20
      %v1208 = vpop.permute.xlu0 %1207
      %1209 = vrot.lane.b32.xlu0 %v1090, 20
      %v1210 = vpop.permute.xlu0 %1209
      %vm1214 = vcmask 195744
      %1215 = vst.msk [vmem:[%s145] sm:$0xff] %vm1214, %v1206
      %1216 = vst.msk [vmem:[%s145 + $0x8] sm:$0xff] %vm1214, %v1208
      %1217 = vst.msk [vmem:[%s145 + $0x10] sm:$0xff] %vm1214, %v1210
      %1221 = vrot.lane.b32.xlu0 %v1180, 24
      %v1222 = vpop.permute.xlu0 %1221
      %1223 = vrot.lane.b32.xlu0 %v1181, 24
      %v1224 = vpop.permute.xlu0 %1223
      %1225 = vrot.lane.b32.xlu0 %v1182, 24
      %v1226 = vpop.permute.xlu0 %1225
      %vm1230 = vcmask 228544
      %1231 = vst.msk [vmem:[%s145] sm:$0xff] %vm1230, %v1222
      %1232 = vst.msk [vmem:[%s145 + $0x8] sm:$0xff] %vm1230, %v1224
      %1233 = vst.msk [vmem:[%s145 + $0x10] sm:$0xff] %vm1230, %v1226
      %vm1234 = vcmask 1047776
      %1235 = vst.msk [vmem:[%s145] sm:$0xff] %vm1234, 0.0
      %1236 = vst.msk [vmem:[%s145 + $0x8] sm:$0xff] %vm1234, 0.0
      %1237 = vst.msk [vmem:[%s145 + $0x10] sm:$0xff] %vm1234, 0.0
      %s1238 = smul.u32 3, %s13
      %p1239 = scmp.lt.s32.totalorder %s1238, 5
      %s1240 = scalar_select %p1239, %s1238, 5
      %s1241 = smul.addr %s1240, 8
      %s1242 = scalar_lea.vmem %s2, %s1241
      // Predicated region
      $region29: #{gcp_embedding_forward.3} parent=27 // pred_check
        %p1243 = pneg %p78
      $region30: #{gcp_embedding_forward.3} parent=27 // pred_check_branch
        %1245 = sbr.rel (%p1243) target = $region32
      $region31: #{gcp_embedding_forward.3} parent=27 // pred_region
        %s1246 = smul.u32 3, %s13
      $region32: #{gcp_embedding_forward.3} parent=27 // pred_fallthru
        _
    $region28: #{gcp_embedding_forward.3} parent=5 // pred_fallthru
      _
    %p1247 = scmp.le.s32.totalorder 2, %s8
    // Predicated region
    $region33: #{gcp_embedding_forward.3} parent=5 // pred_check
      %p1248 = pneg %p1247
    $region34: #{gcp_embedding_forward.3} parent=5 // pred_check_branch
      %1250 = sbr.rel (%p1248) target = $region36
    $region35: #{gcp_embedding_forward.3} parent=5 // pred_region
      %s1251 = ssub.s32 %s8, 2
      // Predicated region
      $region37: #{gcp_embedding_forward.3} parent=35 // pred_check
        %p1252 = pneg %p84
      $region38: #{gcp_embedding_forward.3} parent=35 // pred_check_branch
        %1254 = sbr.rel (%p1252) target = $region40
      $region39: #{gcp_embedding_forward.3} parent=35 // pred_region
        %s1255 = smul.u32 3, %s14
        %p1256 = scmp.lt.s32.totalorder %s1255, 5
        %s1257 = scalar_select %p1256, %s1255, 5
        %s1258 = smul.addr %s1257, 8
        %s1259 = scalar_lea.vmem %s2, %s1258
      $region40: #{gcp_embedding_forward.3} parent=35 // pred_fallthru
        _
    $region36: #{gcp_embedding_forward.3} parent=5 // pred_fallthru
      _
  $region6: #{gcp_embedding_forward.3} parent=0 // loop_footer
    %s12 = sadd.s32 1, %s8
  $region7: #{gcp_embedding_forward.3} parent=0 // loop_footer_branch
    %7 = sbr.rel target = $region3
  $region8: #{gcp_embedding_forward.3} parent=0 // loop_exit
    _

// kernel: gcp_embedding_forward.2
$region0: #{gcp_embedding_forward.2}
  #allocation0 [shape = 'u32[]', space=smem, size = 0x4, offset = 0x4, fixed_abs, tag = 'smem constant byte address 0x4 - core index']
  #allocation1 [shape = 'u32[144,128]{1,0:T(1,128)}', space=vmem, size = 0x12000, scoped, tag = 'internal scratch']
  %s0 = inlined_call_operand.vmem [shape: f32[16,28], index: 0, kind: input, shape index: {}]
  %s1 = inlined_call_operand.vmem [shape: f32[80,128], index: 1, kind: input, shape index: {}]
  %s2 = inlined_call_operand.vmem [shape: f32[16,128], index: 2, kind: output, shape index: {}]
  %s3 = sld [smem:[#allocation0]]
  $region41: #{gcp_embedding_forward.2} parent=0
    _
  %s5 = ssub.s32 1, %s3
  %s6 = scalar_select 0, %s5, %s3
  loop: start=0, step=1, limit=4
  $region2: #{gcp_embedding_forward.2} parent=0 // loop_pre_header
    _
  $region3: #{gcp_embedding_forward.2} parent=0 // loop_header
    %s8 = sphi 0, %s12
    %p9 = scmp.ge.s32.totalorder %s8, 4
    %s18 = sphi 0, %s20
    %s21 = sphi 0, %s18
    %s22 = sphi 0, %s21
    %s38 = sphi 0, %s22
    %s42 = sphi 0, %s42
    %s44 = sphi 0, %s42
    %s45 = sphi 0, %s44
    %s59 = sphi 0, %s45
    %s65 = sphi 0, %s67
    %s68 = sphi 0, %s65
    %s69 = sphi 0, %s68
    %s85 = sphi 0, %s69
  $region4: #{gcp_embedding_forward.2} parent=0 // loop_header_branch
    %11 = sbr.rel (%p9) target = $region8
  $region5: #{gcp_embedding_forward.2} parent=0 // loop_body
    %s13 = ssub.s32 %s8, 1
    %s14 = ssub.s32 %s8, 2
    %s15 = sadd.s32 %s8, 1
    %s16 = ssub.s32 %s8, %s15
    %p17 = scmp.eq.s32.totalorder %s16, 0
    %s19 = sadd.s32 %s18, 1
    %s20 = scalar_select %p17, %s18, %s19
    %p23 = pneg %p17
    %p24 = scmp.eq.s32.totalorder %s8, 1
    %p25 = por %p23, %p24
    %p26 = scmp.ne.s32.totalorder %s18, %s21
    %p27 = scmp.eq.s32.totalorder %s8, 0
    %p28 = por %p26, %p27
    %p29 = scmp.ne.s32.totalorder %s18, %s21
    %p30 = scmp.eq.s32.totalorder %s13, 1
    %p31 = por %p29, %p30
    %p32 = scmp.ne.s32.totalorder %s21, %s22
    %p33 = scmp.eq.s32.totalorder %s13, 0
    %p34 = por %p32, %p33
    %p35 = scmp.ne.s32.totalorder %s21, %s22
    %p36 = scmp.eq.s32.totalorder %s14, 1
    %p37 = por %p35, %p36
    %p39 = scmp.ne.s32.totalorder %s22, %s38
    %p40 = scmp.eq.s32.totalorder %s14, 0
    %p41 = por %p39, %p40
    %s43 = sadd.s32 %s42, 1
    %p46 = scmp.eq.s32.totalorder %s8, 1
    %p47 = scmp.ne.s32.totalorder %s42, %s44
    %p48 = scmp.eq.s32.totalorder %s8, 0
    %p49 = por %p47, %p48
    %p50 = scmp.ne.s32.totalorder %s42, %s44
    %p51 = scmp.eq.s32.totalorder %s13, 1
    %p52 = por %p50, %p51
    %p53 = scmp.ne.s32.totalorder %s44, %s45
    %p54 = scmp.eq.s32.totalorder %s13, 0
    %p55 = por %p53, %p54
    %p56 = scmp.ne.s32.totalorder %s44, %s45
    %p57 = scmp.eq.s32.totalorder %s14, 1
    %p58 = por %p56, %p57
    %p60 = scmp.ne.s32.totalorder %s45, %s59
    %p61 = scmp.eq.s32.totalorder %s14, 0
    %p62 = por %p60, %p61
    %s63 = ssub.s32 %s8, %s15
    %p64 = scmp.eq.s32.totalorder %s63, 0
    %s66 = sadd.s32 %s65, 1
    %s67 = scalar_select %p64, %s65, %s66
    %p70 = pneg %p64
    %p71 = scmp.eq.s32.totalorder %s8, 1
    %p72 = por %p70, %p71
    %p73 = scmp.ne.s32.totalorder %s65, %s68
    %p74 = scmp.eq.s32.totalorder %s8, 0
    %p75 = por %p73, %p74
    %p76 = scmp.ne.s32.totalorder %s65, %s68
    %p77 = scmp.eq.s32.totalorder %s13, 1
    %p78 = por %p76, %p77
    %p79 = scmp.ne.s32.totalorder %s68, %s69
    %p80 = scmp.eq.s32.totalorder %s13, 0
    %p81 = por %p79, %p80
    %p82 = scmp.ne.s32.totalorder %s68, %s69
    %p83 = scmp.eq.s32.totalorder %s14, 1
    %p84 = por %p82, %p83
    %p86 = scmp.ne.s32.totalorder %s69, %s85
    %p87 = scmp.eq.s32.totalorder %s14, 0
    %p88 = por %p86, %p87
    %p89 = scmp.le.s32.totalorder 1, %s8
    %p90 = scmp.lt.s32.totalorder %s8, 3
    %p91 = pnand %p89, %p90
    %p92 = pneg %p91
    // Predicated region
    $region9: #{gcp_embedding_forward.2} parent=5 // pred_check
      _
    $region10: #{gcp_embedding_forward.2} parent=5 // pred_check_branch
      %94 = sbr.rel (%p91) target = $region12
    $region11: #{gcp_embedding_forward.2} parent=5 // pred_region
      %s95 = ssub.s32 %s8, 1
      // Predicated region
      $region13: #{gcp_embedding_forward.2} parent=11 // pred_check
        %p96 = pneg %p55
      $region14: #{gcp_embedding_forward.2} parent=11 // pred_check_branch
        %98 = sbr.rel (%p96) target = $region16
      $region15: #{gcp_embedding_forward.2} parent=11 // pred_region
        _
      $region16: #{gcp_embedding_forward.2} parent=11 // pred_fallthru
        _
    $region12: #{gcp_embedding_forward.2} parent=5 // pred_fallthru
      _
    %p99 = scmp.lt.s32.totalorder %s8, 2
    // Predicated region
    $region17: #{gcp_embedding_forward.2} parent=5 // pred_check
      %p100 = pneg %p99
    $region18: #{gcp_embedding_forward.2} parent=5 // pred_check_branch
      %102 = sbr.rel (%p100) target = $region20
    $region19: #{gcp_embedding_forward.2} parent=5 // pred_region
      // Predicated region
      $region21: #{gcp_embedding_forward.2} parent=19 // pred_check
        %p103 = pneg %p28
      $region22: #{gcp_embedding_forward.2} parent=19 // pred_check_branch
        %105 = sbr.rel (%p103) target = $region24
      $region23: #{gcp_embedding_forward.2} parent=19 // pred_region
        %p106 = scmp.lt.s32.totalorder %s8, 1
        %s107 = scalar_select %p106, %s8, 1
        %s108 = smul.addr %s107, 8
        %s109 = scalar_lea.vmem %s0, %s108
      $region24: #{gcp_embedding_forward.2} parent=19 // pred_fallthru
        _
    $region20: #{gcp_embedding_forward.2} parent=5 // pred_fallthru
      _
    %p110 = scmp.le.s32.totalorder 1, %s8
    %p111 = scmp.lt.s32.totalorder %s8, 3
    %p112 = pnand %p110, %p111
    %p113 = pneg %p112
    // Predicated region
    $region25: #{gcp_embedding_forward.2} parent=5 // pred_check
      _
    $region26: #{gcp_embedding_forward.2} parent=5 // pred_check_branch
      %115 = sbr.rel (%p112) target = $region28
    $region27: #{gcp_embedding_forward.2} parent=5 // pred_region
      %s116 = ssub.s32 %s8, 1
      %p117 = scmp.lt.s32.totalorder %s13, 1
      %s118 = scalar_select %p117, %s13, 1
      %s119 = smul.addr %s118, 8
      %s120 = scalar_lea.vmem %s0, %s119
      %p121 = pneg %p34
      %p122 = pneg %p31
      %p123 = pneg %p55
      %p124 = pneg %p52
      %p125 = pneg %p81
      %p126 = pneg %p78
      %p127 = scmp.lt.s32.totalorder %s13, 1
      %s128 = scalar_select %p127, %s13, 1
      %s129 = smul.addr %s128, 8
      %s130 = scalar_lea.vmem %s2, %s129
      %p131 = scmp.lt.s32.totalorder %s13, 1
      %s132 = scalar_select %p131, %s13, 1
      %s133 = smul.addr %s132, 8
      %s134 = scalar_lea.vmem %s0, %s133
      %p135 = scmp.lt.s32.totalorder %s13, 1
      %s136 = scalar_select %p135, %s13, 1
      %s137 = smul.addr %s136, 8
      %s138 = scalar_lea.vmem %s2, %s137
      %v139 = vld [vmem:[%s134] sm:$0xff]
      %v140 = vld [vmem:[%s1] sm:$0x1]
      %v141 = vld [vmem:[%s1 + $0x1] sm:$0x1]
      %v142 = vld [vmem:[%s1 + $0x2] sm:$0x1]
      %v143 = vld [vmem:[%s1 + $0x3] sm:$0x1]
      %v144 = vld [vmem:[%s1 + $0x8] sm:$0xf]
      %v145 = vld [vmem:[%s1 + $0x10] sm:$0xff]
      %v146 = vld [vmem:[%s1 + $0x18] sm:$0xff]
      %v147 = vld [vmem:[%s1 + $0x20] sm:$0xff]
      %v148 = vld [vmem:[%s1 + $0x28] sm:$0xff]
      %v149 = vld [vmem:[%s1 + $0x30] sm:$0xff]
      %v150 = vld [vmem:[%s1 + $0x38] sm:$0xff]
      %v151 = vld [vmem:[%s1 + $0x40] sm:$0xff]
      %v152 = vld [vmem:[%s1 + $0x48] sm:$0xff]
      %vm153 = vcmask 130048
      %v154 = vsel %vm153, %v139, 0.0
      %155 = vadd.xlane.f32.xlu0 %v154
      %v156 = vpop.xlane.xlu0 %155
      %v157 = vrcp.pop 16.0
      %v158 = vmul.f32 %v156, %v157
      %v159 = vsub.f32 %v139, %v158
      %v160 = vmul.f32 %v159, %v159
      %v161 = vsel %vm153, %v160, 0.0
      %162 = vadd.xlane.f32.xlu0 %v161
      %v163 = vpop.xlane.xlu0 %162
      %v164 = vmul.f32 %v163, %v157
      %v165 = vadd.f32 %v164, 1e-05
      %v166 = vrsqrt.pop %v165
      %v167 = vmul.f32 %v159, %v166
      %v168 = vlaneseq
      %v169 = vshrl.u32 %v168, 7
      %v170 = vsub.s32 0, %v169
      %v171 = vrot.slane %v140, %v170
      %v172 = vmul.f32 %v167, %v171
      %v173 = vlaneseq
      %v174 = vshrl.u32 %v173, 7
      %v175 = vsub.s32 0, %v174
      %v176 = vrot.slane %v141, %v175
      %v177 = vadd.f32 %v172, %v176
      %v178 = vmul.f32 %v139, %v139
      %180 = vrot.lane.b32.xlu0 %v178, 124
      %v181 = vpop.permute.xlu0 %180
      %v183 = vadd.f32 %v178, %v181
      %184 = vrot.lane.b32.xlu0 %v178, 120
      %v185 = vpop.permute.xlu0 %184
      %v187 = vadd.f32 %v183, %v185
      %v188 = vmax.f32 %v187, 1e-08
      %190 = vrot.lane.b32.xlu0 %v188, 112
      %v191 = vpop.permute.xlu0 %190
      %vm193 = vcmask 31744
      %v194 = vsel %vm193, %v191, 0.0
      %195 = vadd.xlane.f32.xlu0 %v194
      %v196 = vpop.xlane.xlu0 %195
      %v197 = vrcp.pop 4.0
      %v198 = vmul.f32 %v196, %v197
      %v199 = vrsqrt.pop %v198
      %v200 = vmul.f32 %v139, %v199
      %202 = vrot.lane.b32.xlu0 %v200, 112
      %v203 = vpop.permute.xlu0 %202
      %v204 = vsel %vm193, %v203, 0
      %vm206 = vcmask 1043456
      %v208 = vsel %vm206, %v144, 0
      %210 = vmatprep.subr.mxu0 0.0
      %211 = vmatpush1.msra.mxu0 0.0
      %212 = vmatprep.subr.mxu0 0.0
      %213 = vmatpush1.msra.mxu0 0.0
      %214 = vmatprep.subr.mxu0 0.0
      %215 = vmatpush1.msra.mxu0 0.0
      %216 = vmatprep.subr.mxu0 0.0
      %217 = vmatpush1.msra.mxu0 0.0
      %218 = vmatprep.subr.mxu0 0.0
      %219 = vmatpush1.msra.mxu0 0.0
      %220 = vmatprep.subr.mxu0 0.0
      %221 = vmatpush1.msra.mxu0 0.0
      %222 = vmatprep.subr.mxu0 0.0
      %223 = vmatpush1.msra.mxu0 0.0
      %224 = vmatprep.subr.mxu0 0.0
      %225 = vmatpush1.msra.mxu0 0.0
      %226 = vmatprep.subr.mxu0 0.0
      %227 = vmatpush1.msra.mxu0 0.0
      %228 = vmatprep.subr.mxu0 0.0
      %229 = vmatpush1.msra.mxu0 0.0
      %230 = vmatprep.subr.mxu0 0.0
      %231 = vmatpush1.msra.mxu0 0.0
      %232 = vmatprep.subr.mxu0 0.0
      %233 = vmatpush1.msra.mxu0 0.0
      %234 = vmatprep.subr.mxu0 0.0
      %235 = vmatpush1.msra.mxu0 0.0
      %236 = vmatprep.subr.mxu0 0.0
      %237 = vmatpush1.msra.mxu0 0.0
      %238 = vmatprep.subr.mxu0 0.0
      %239 = vmatpush1.msra.mxu0 0.0
      %240 = vmatprep.subr.mxu0 0.0
      %241 = vmatpush1.msra.mxu0 %v208
      %242 = vmatprep.subr.mxu0 0.0
      %243 = vmatpush2.msra.mxu0 0.0
      %244 = vmatprep.subr.mxu0 0.0
      %245 = vmatpush2.msra.mxu0 0.0
      %246 = vmatprep.subr.mxu0 0.0
      %247 = vmatpush2.msra.mxu0 0.0
      %248 = vmatprep.subr.mxu0 0.0
      %249 = vmatpush2.msra.mxu0 0.0
      %250 = vmatprep.subr.mxu0 0.0
      %251 = vmatpush2.msra.mxu0 0.0
      %252 = vmatprep.subr.mxu0 0.0
      %253 = vmatpush2.msra.mxu0 0.0
      %254 = vmatprep.subr.mxu0 0.0
      %255 = vmatpush2.msra.mxu0 0.0
      %256 = vmatprep.subr.mxu0 0.0
      %257 = vmatpush2.msra.mxu0 0.0
      %258 = vmatprep.subr.mxu0 0.0
      %259 = vmatpush2.msra.mxu0 0.0
      %260 = vmatprep.subr.mxu0 0.0
      %261 = vmatpush2.msra.mxu0 0.0
      %262 = vmatprep.subr.mxu0 0.0
      %263 = vmatpush2.msra.mxu0 0.0
      %264 = vmatprep.subr.mxu0 0.0
      %265 = vmatpush2.msra.mxu0 0.0
      %266 = vmatprep.subr.mxu0 0.0
      %267 = vmatpush2.msra.mxu0 0.0
      %268 = vmatprep.subr.mxu0 0.0
      %269 = vmatpush2.msra.mxu0 0.0
      %270 = vmatprep.subr.mxu0 0.0
      %271 = vmatpush2.msra.mxu0 0.0
      %272 = vmatprep.subr.mxu0 0.0
      %273 = vmatpush2.msra.mxu0 0.0
      %274 = vmatprep.mubr.f32.mxu0 0.0
      %275 = vmatmul.mubr.f32.gmra.mxu0 %v204
      %v276 = vpop.f32.mrf.mxu0
      %v277 = vadd.f32 0.0, %v276
      %v278 = vpop.f32.mrf.mxu0
      %279 = vdwg.mxu0
      %280 = vrot.lane.b32.xlu0 %v200, 108
      %v281 = vpop.permute.xlu0 %280
      %v282 = vsel %vm193, %v281, 0
      %284 = vmatprep.subr.mxu0 0.0
      %285 = vmatpush1.msra.mxu0 0.0
      %286 = vmatprep.subr.mxu0 0.0
      %287 = vmatpush1.msra.mxu0 0.0
      %288 = vmatprep.subr.mxu0 0.0
      %289 = vmatpush1.msra.mxu0 0.0
      %290 = vmatprep.subr.mxu0 0.0
      %291 = vmatpush1.msra.mxu0 0.0
      %292 = vmatprep.subr.mxu0 0.0
      %293 = vmatpush1.msra.mxu0 0.0
      %294 = vmatprep.subr.mxu0 0.0
      %295 = vmatpush1.msra.mxu0 0.0
      %296 = vmatprep.subr.mxu0 0.0
      %297 = vmatpush1.msra.mxu0 0.0
      %298 = vmatprep.subr.mxu0 0.0
      %299 = vmatpush1.msra.mxu0 0.0
      %300 = vmatprep.subr.mxu0 0.0
      %301 = vmatpush1.msra.mxu0 0.0
      %302 = vmatprep.subr.mxu0 0.0
      %303 = vmatpush1.msra.mxu0 0.0
      %304 = vmatprep.subr.mxu0 0.0
      %305 = vmatpush1.msra.mxu0 0.0
      %306 = vmatprep.subr.mxu0 0.0
      %307 = vmatpush1.msra.mxu0 0.0
      %308 = vmatprep.subr.mxu0 0.0
      %309 = vmatpush1.msra.mxu0 0.0
      %310 = vmatprep.subr.mxu0 0.0
      %311 = vmatpush1.msra.mxu0 0.0
      %312 = vmatprep.subr.mxu0 0.0
      %313 = vmatpush1.msra.mxu0 0.0
      %314 = vmatprep.subr.mxu0 0.0
      %315 = vmatpush1.msra.mxu0 %v208
      %316 = vmatprep.subr.mxu0 0.0
      %317 = vmatpush2.msra.mxu0 0.0
      %318 = vmatprep.subr.mxu0 0.0
      %319 = vmatpush2.msra.mxu0 0.0
      %320 = vmatprep.subr.mxu0 0.0
      %321 = vmatpush2.msra.mxu0 0.0
      %322 = vmatprep.subr.mxu0 0.0
      %323 = vmatpush2.msra.mxu0 0.0
      %324 = vmatprep.subr.mxu0 0.0
      %325 = vmatpush2.msra.mxu0 0.0
      %326 = vmatprep.subr.mxu0 0.0
      %327 = vmatpush2.msra.mxu0 0.0
      %328 = vmatprep.subr.mxu0 0.0
      %329 = vmatpush2.msra.mxu0 0.0
      %330 = vmatprep.subr.mxu0 0.0
      %331 = vmatpush2.msra.mxu0 0.0
      %332 = vmatprep.subr.mxu0 0.0
      %333 = vmatpush2.msra.mxu0 0.0
      %334 = vmatprep.subr.mxu0 0.0
      %335 = vmatpush2.msra.mxu0 0.0
      %336 = vmatprep.subr.mxu0 0.0
      %337 = vmatpush2.msra.mxu0 0.0
      %338 = vmatprep.subr.mxu0 0.0
      %339 = vmatpush2.msra.mxu0 0.0
      %340 = vmatprep.subr.mxu0 0.0
      %341 = vmatpush2.msra.mxu0 0.0
      %342 = vmatprep.subr.mxu0 0.0
      %343 = vmatpush2.msra.mxu0 0.0
      %344 = vmatprep.subr.mxu0 0.0
      %345 = vmatpush2.msra.mxu0 0.0
      %346 = vmatprep.subr.mxu0 0.0
      %347 = vmatpush2.msra.mxu0 0.0
      %348 = vmatprep.mubr.f32.mxu0 0.0
      %349 = vmatmul.mubr.f32.gmra.mxu0 %v282
      %v350 = vpop.f32.mrf.mxu0
      %v351 = vadd.f32 0.0, %v350
      %v352 = vpop.f32.mrf.mxu0
      %353 = vdwg.mxu0
      %354 = vrot.lane.b32.xlu0 %v200, 104
      %v355 = vpop.permute.xlu0 %354
      %v356 = vsel %vm193, %v355, 0
      %358 = vmatprep.subr.mxu0 0.0
      %359 = vmatpush1.msra.mxu0 0.0
      %360 = vmatprep.subr.mxu0 0.0
      %361 = vmatpush1.msra.mxu0 0.0
      %362 = vmatprep.subr.mxu0 0.0
      %363 = vmatpush1.msra.mxu0 0.0
      %364 = vmatprep.subr.mxu0 0.0
      %365 = vmatpush1.msra.mxu0 0.0
      %366 = vmatprep.subr.mxu0 0.0
      %367 = vmatpush1.msra.mxu0 0.0
      %368 = vmatprep.subr.mxu0 0.0
      %369 = vmatpush1.msra.mxu0 0.0
      %370 = vmatprep.subr.mxu0 0.0
      %371 = vmatpush1.msra.mxu0 0.0
      %372 = vmatprep.subr.mxu0 0.0
      %373 = vmatpush1.msra.mxu0 0.0
      %374 = vmatprep.subr.mxu0 0.0
      %375 = vmatpush1.msra.mxu0 0.0
      %376 = vmatprep.subr.mxu0 0.0
      %377 = vmatpush1.msra.mxu0 0.0
      %378 = vmatprep.subr.mxu0 0.0
      %379 = vmatpush1.msra.mxu0 0.0
      %380 = vmatprep.subr.mxu0 0.0
      %381 = vmatpush1.msra.mxu0 0.0
      %382 = vmatprep.subr.mxu0 0.0
      %383 = vmatpush1.msra.mxu0 0.0
      %384 = vmatprep.subr.mxu0 0.0
      %385 = vmatpush1.msra.mxu0 0.0
      %386 = vmatprep.subr.mxu0 0.0
      %387 = vmatpush1.msra.mxu0 0.0
      %388 = vmatprep.subr.mxu0 0.0
      %389 = vmatpush1.msra.mxu0 %v208
      %390 = vmatprep.subr.mxu0 0.0
      %391 = vmatpush2.msra.mxu0 0.0
      %392 = vmatprep.subr.mxu0 0.0
      %393 = vmatpush2.msra.mxu0 0.0
      %394 = vmatprep.subr.mxu0 0.0
      %395 = vmatpush2.msra.mxu0 0.0
      %396 = vmatprep.subr.mxu0 0.0
      %397 = vmatpush2.msra.mxu0 0.0
      %398 = vmatprep.subr.mxu0 0.0
      %399 = vmatpush2.msra.mxu0 0.0
      %400 = vmatprep.subr.mxu0 0.0
      %401 = vmatpush2.msra.mxu0 0.0
      %402 = vmatprep.subr.mxu0 0.0
      %403 = vmatpush2.msra.mxu0 0.0
      %404 = vmatprep.subr.mxu0 0.0
      %405 = vmatpush2.msra.mxu0 0.0
      %406 = vmatprep.subr.mxu0 0.0
      %407 = vmatpush2.msra.mxu0 0.0
      %408 = vmatprep.subr.mxu0 0.0
      %409 = vmatpush2.msra.mxu0 0.0
      %410 = vmatprep.subr.mxu0 0.0
      %411 = vmatpush2.msra.mxu0 0.0
      %412 = vmatprep.subr.mxu0 0.0
      %413 = vmatpush2.msra.mxu0 0.0
      %414 = vmatprep.subr.mxu0 0.0
      %415 = vmatpush2.msra.mxu0 0.0
      %416 = vmatprep.subr.mxu0 0.0
      %417 = vmatpush2.msra.mxu0 0.0
      %418 = vmatprep.subr.mxu0 0.0
      %419 = vmatpush2.msra.mxu0 0.0
      %420 = vmatprep.subr.mxu0 0.0
      %421 = vmatpush2.msra.mxu0 0.0
      %422 = vmatprep.mubr.f32.mxu0 0.0
      %423 = vmatmul.mubr.f32.gmra.mxu0 %v356
      %v424 = vpop.f32.mrf.mxu0
      %v425 = vadd.f32 0.0, %v424
      %v426 = vpop.f32.mrf.mxu0
      %427 = vdwg.mxu0
      %v428 = vmul.f32 %v277, %v277
      %v429 = vmul.f32 %v351, %v351
      %v430 = vadd.f32 %v428, %v429
      %v431 = vmul.f32 %v425, %v425
      %v432 = vadd.f32 %v430, %v431
      %v433 = vmax.f32 %v432, 1e-08
      %v434 = vrsqrt.pop %v433
      %v435 = vmul.f32 %v433, %v434
      %vm436 = vcmp.eq.f32.partialorder %v433, inf
      %v437 = vsel %vm436, %v433, %v435
      %vm438 = vcmp.eq.f32.partialorder %v433, 0.0
      %v439 = vand.u32 %v433, 2147483648
      %v440 = vsel %vm438, %v439, %v437
      %vm441 = vcmask 64512
      %v443 = vsel %vm441, %v440, 0
      %445 = vmatprep.subr.mxu0 0.0
      %446 = vmatpush1.msra.mxu0 0.0
      %447 = vmatprep.subr.mxu0 0.0
      %448 = vmatpush1.msra.mxu0 0.0
      %449 = vmatprep.subr.mxu0 0.0
      %450 = vmatpush1.msra.mxu0 0.0
      %451 = vmatprep.subr.mxu0 0.0
      %452 = vmatpush1.msra.mxu0 0.0
      %453 = vmatprep.subr.mxu0 0.0
      %454 = vmatpush1.msra.mxu0 0.0
      %455 = vmatprep.subr.mxu0 0.0
      %456 = vmatpush1.msra.mxu0 0.0
      %457 = vmatprep.subr.mxu0 0.0
      %458 = vmatpush1.msra.mxu0 0.0
      %459 = vmatprep.subr.mxu0 0.0
      %460 = vmatpush1.msra.mxu0 0.0
      %461 = vmatprep.subr.mxu0 0.0
      %462 = vmatpush1.msra.mxu0 0.0
      %463 = vmatprep.subr.mxu0 0.0
      %464 = vmatpush1.msra.mxu0 0.0
      %465 = vmatprep.subr.mxu0 0.0
      %466 = vmatpush1.msra.mxu0 0.0
      %467 = vmatprep.subr.mxu0 0.0
      %468 = vmatpush1.msra.mxu0 0.0
      %469 = vmatprep.subr.mxu0 0.0
      %470 = vmatpush1.msra.mxu0 0.0
      %471 = vmatprep.subr.mxu0 0.0
      %472 = vmatpush1.msra.mxu0 0.0
      %473 = vmatprep.subr.mxu0 0.0
      %474 = vmatpush1.msra.mxu0 0.0
      %475 = vmatprep.subr.mxu0 0.0
      %476 = vmatpush1.msra.mxu0 %v147
      %477 = vmatprep.subr.mxu0 0.0
      %478 = vmatpush2.msra.mxu0 0.0
      %479 = vmatprep.subr.mxu0 0.0
      %480 = vmatpush2.msra.mxu0 0.0
      %481 = vmatprep.subr.mxu0 0.0
      %482 = vmatpush2.msra.mxu0 0.0
      %483 = vmatprep.subr.mxu0 0.0
      %484 = vmatpush2.msra.mxu0 0.0
      %485 = vmatprep.subr.mxu0 0.0
      %486 = vmatpush2.msra.mxu0 0.0
      %487 = vmatprep.subr.mxu0 0.0
      %488 = vmatpush2.msra.mxu0 0.0
      %489 = vmatprep.subr.mxu0 0.0
      %490 = vmatpush2.msra.mxu0 0.0
      %491 = vmatprep.subr.mxu0 0.0
      %492 = vmatpush2.msra.mxu0 0.0
      %493 = vmatprep.subr.mxu0 0.0
      %494 = vmatpush2.msra.mxu0 0.0
      %495 = vmatprep.subr.mxu0 0.0
      %496 = vmatpush2.msra.mxu0 0.0
      %497 = vmatprep.subr.mxu0 0.0
      %498 = vmatpush2.msra.mxu0 0.0
      %499 = vmatprep.subr.mxu0 0.0
      %500 = vmatpush2.msra.mxu0 0.0
      %501 = vmatprep.subr.mxu0 0.0
      %502 = vmatpush2.msra.mxu0 0.0
      %503 = vmatprep.subr.mxu0 0.0
      %504 = vmatpush2.msra.mxu0 0.0
      %505 = vmatprep.subr.mxu0 0.0
      %506 = vmatpush2.msra.mxu0 0.0
      %507 = vmatprep.subr.mxu0 0.0
      %508 = vmatpush2.msra.mxu0 0.0
      %509 = vmatprep.mubr.f32.mxu0 0.0
      %510 = vmatmul.mubr.f32.gmra.mxu0 %v443
      %v511 = vpop.f32.mrf.mxu0
      %v512 = vadd.f32 0.0, %v511
      %v513 = vpop.f32.mrf.mxu0
      %514 = vdwg.mxu0
      %v516 = vsel %vm153, %v177, 0
      %518 = vmatprep.subr.mxu0 0.0
      %519 = vmatpush1.msra.mxu0 0.0
      %520 = vmatprep.subr.mxu0 0.0
      %521 = vmatpush1.msra.mxu0 0.0
      %522 = vmatprep.subr.mxu0 0.0
      %523 = vmatpush1.msra.mxu0 0.0
      %524 = vmatprep.subr.mxu0 0.0
      %525 = vmatpush1.msra.mxu0 0.0
      %526 = vmatprep.subr.mxu0 0.0
      %527 = vmatpush1.msra.mxu0 0.0
      %528 = vmatprep.subr.mxu0 0.0
      %529 = vmatpush1.msra.mxu0 0.0
      %530 = vmatprep.subr.mxu0 0.0
      %531 = vmatpush1.msra.mxu0 0.0
      %532 = vmatprep.subr.mxu0 0.0
      %533 = vmatpush1.msra.mxu0 0.0
      %534 = vmatprep.subr.mxu0 0.0
      %535 = vmatpush1.msra.mxu0 0.0
      %536 = vmatprep.subr.mxu0 0.0
      %537 = vmatpush1.msra.mxu0 0.0
      %538 = vmatprep.subr.mxu0 0.0
      %539 = vmatpush1.msra.mxu0 0.0
      %540 = vmatprep.subr.mxu0 0.0
      %541 = vmatpush1.msra.mxu0 0.0
      %542 = vmatprep.subr.mxu0 0.0
      %543 = vmatpush1.msra.mxu0 0.0
      %544 = vmatprep.subr.mxu0 0.0
      %545 = vmatpush1.msra.mxu0 0.0
      %546 = vmatprep.subr.mxu0 0.0
      %547 = vmatpush1.msra.mxu0 %v146
      %548 = vmatprep.subr.mxu0 0.0
      %549 = vmatpush1.msra.mxu0 %v145
      %550 = vmatprep.subr.mxu0 0.0
      %551 = vmatpush2.msra.mxu0 0.0
      %552 = vmatprep.subr.mxu0 0.0
      %553 = vmatpush2.msra.mxu0 0.0
      %554 = vmatprep.subr.mxu0 0.0
      %555 = vmatpush2.msra.mxu0 0.0
      %556 = vmatprep.subr.mxu0 0.0
      %557 = vmatpush2.msra.mxu0 0.0
      %558 = vmatprep.subr.mxu0 0.0
      %559 = vmatpush2.msra.mxu0 0.0
      %560 = vmatprep.subr.mxu0 0.0
      %561 = vmatpush2.msra.mxu0 0.0
      %562 = vmatprep.subr.mxu0 0.0
      %563 = vmatpush2.msra.mxu0 0.0
      %564 = vmatprep.subr.mxu0 0.0
      %565 = vmatpush2.msra.mxu0 0.0
      %566 = vmatprep.subr.mxu0 0.0
      %567 = vmatpush2.msra.mxu0 0.0
      %568 = vmatprep.subr.mxu0 0.0
      %569 = vmatpush2.msra.mxu0 0.0
      %570 = vmatprep.subr.mxu0 0.0
      %571 = vmatpush2.msra.mxu0 0.0
      %572 = vmatprep.subr.mxu0 0.0
      %573 = vmatpush2.msra.mxu0 0.0
      %574 = vmatprep.subr.mxu0 0.0
      %575 = vmatpush2.msra.mxu0 0.0
      %576 = vmatprep.subr.mxu0 0.0
      %577 = vmatpush2.msra.mxu0 0.0
      %578 = vmatprep.subr.mxu0 0.0
      %579 = vmatpush2.msra.mxu0 0.0
      %580 = vmatprep.subr.mxu0 0.0
      %581 = vmatpush2.msra.mxu0 0.0
      %582 = vmatprep.mubr.f32.mxu0 0.0
      %583 = vmatmul.mubr.f32.gmra.mxu0 %v516
      %v584 = vpop.f32.mrf.mxu0
      %v585 = vadd.f32 %v512, %v584
      %v586 = vpop.f32.mrf.mxu0
      %587 = vdwg.mxu0
      %v588 = vlaneseq
      %v589 = vshrl.u32 %v588, 7
      %v590 = vsub.s32 0, %v589
      %v591 = vrot.slane %v142, %v590
      %v592 = vadd.f32 %v585, %v591
      %v593 = vlaneseq
      %v594 = vshrl.u32 %v593, 7
      %v595 = vsub.s32 0, %v594
      %v596 = vrot.slane %v143, %v595
      %vm597 = vcmask 261120
      %v599 = vsel %vm597, %v592, 0
      %601 = vmatprep.subr.mxu0 0.0
      %602 = vmatpush1.msra.mxu0 0.0
      %603 = vmatprep.subr.mxu0 0.0
      %604 = vmatpush1.msra.mxu0 0.0
      %605 = vmatprep.subr.mxu0 0.0
      %606 = vmatpush1.msra.mxu0 0.0
      %607 = vmatprep.subr.mxu0 0.0
      %608 = vmatpush1.msra.mxu0 0.0
      %609 = vmatprep.subr.mxu0 0.0
      %610 = vmatpush1.msra.mxu0 0.0
      %611 = vmatprep.subr.mxu0 0.0
      %612 = vmatpush1.msra.mxu0 0.0
      %613 = vmatprep.subr.mxu0 0.0
      %614 = vmatpush1.msra.mxu0 0.0
      %615 = vmatprep.subr.mxu0 0.0
      %616 = vmatpush1.msra.mxu0 0.0
      %617 = vmatprep.subr.mxu0 0.0
      %618 = vmatpush1.msra.mxu0 0.0
      %619 = vmatprep.subr.mxu0 0.0
      %620 = vmatpush1.msra.mxu0 0.0
      %621 = vmatprep.subr.mxu0 0.0
      %622 = vmatpush1.msra.mxu0 0.0
      %623 = vmatprep.subr.mxu0 0.0
      %624 = vmatpush1.msra.mxu0 0.0
      %625 = vmatprep.subr.mxu0 0.0
      %626 = vmatpush1.msra.mxu0 %v152
      %627 = vmatprep.subr.mxu0 0.0
      %628 = vmatpush1.msra.mxu0 %v151
      %629 = vmatprep.subr.mxu0 0.0
      %630 = vmatpush1.msra.mxu0 %v150
      %631 = vmatprep.subr.mxu0 0.0
      %632 = vmatpush1.msra.mxu0 %v149
      %633 = vmatprep.subr.mxu0 0.0
      %634 = vmatpush2.msra.mxu0 0.0
      %635 = vmatprep.subr.mxu0 0.0
      %636 = vmatpush2.msra.mxu0 0.0
      %637 = vmatprep.subr.mxu0 0.0
      %638 = vmatpush2.msra.mxu0 0.0
      %639 = vmatprep.subr.mxu0 0.0
      %640 = vmatpush2.msra.mxu0 0.0
      %641 = vmatprep.subr.mxu0 0.0
      %642 = vmatpush2.msra.mxu0 0.0
      %643 = vmatprep.subr.mxu0 0.0
      %644 = vmatpush2.msra.mxu0 0.0
      %645 = vmatprep.subr.mxu0 0.0
      %646 = vmatpush2.msra.mxu0 0.0
      %647 = vmatprep.subr.mxu0 0.0
      %648 = vmatpush2.msra.mxu0 0.0
      %649 = vmatprep.subr.mxu0 0.0
      %650 = vmatpush2.msra.mxu0 0.0
      %651 = vmatprep.subr.mxu0 0.0
      %652 = vmatpush2.msra.mxu0 0.0
      %653 = vmatprep.subr.mxu0 0.0
      %654 = vmatpush2.msra.mxu0 0.0
      %655 = vmatprep.subr.mxu0 0.0
      %656 = vmatpush2.msra.mxu0 0.0
      %657 = vmatprep.subr.mxu0 0.0
      %658 = vmatpush2.msra.mxu0 0.0
      %659 = vmatprep.subr.mxu0 0.0
      %660 = vmatpush2.msra.mxu0 0.0
      %661 = vmatprep.subr.mxu0 0.0
      %662 = vmatpush2.msra.mxu0 0.0
      %663 = vmatprep.subr.mxu0 0.0
      %664 = vmatpush2.msra.mxu0 0.0
      %665 = vmatprep.mubr.f32.mxu0 0.0
      %666 = vmatmul.mubr.f32.gmra.mxu0 %v599
      %v667 = vpop.f32.mrf.mxu0
      %v668 = vadd.f32 %v596, %v667
      %v669 = vpop.f32.mrf.mxu0
      %670 = vdwg.mxu0
      %v671 = vxor.u32 %v668, 2147483648
      %v672 = vmul.f32 %v671, 1.442695
      %v673 = vpow.pop %v672
      %v674 = vadd.f32 %v673, 1.0
      %v675 = vrcp.pop %v674
      %v676 = vmul.f32 1.0, %v675
      %v678 = vsel %vm441, %v277, 0
      %680 = vmatprep.subr.mxu0 0.0
      %681 = vmatpush1.msra.mxu0 0.0
      %682 = vmatprep.subr.mxu0 0.0
      %683 = vmatpush1.msra.mxu0 0.0
      %684 = vmatprep.subr.mxu0 0.0
      %685 = vmatpush1.msra.mxu0 0.0
      %686 = vmatprep.subr.mxu0 0.0
      %687 = vmatpush1.msra.mxu0 0.0
      %688 = vmatprep.subr.mxu0 0.0
      %689 = vmatpush1.msra.mxu0 0.0
      %690 = vmatprep.subr.mxu0 0.0
      %691 = vmatpush1.msra.mxu0 0.0
      %692 = vmatprep.subr.mxu0 0.0
      %693 = vmatpush1.msra.mxu0 0.0
      %694 = vmatprep.subr.mxu0 0.0
      %695 = vmatpush1.msra.mxu0 0.0
      %696 = vmatprep.subr.mxu0 0.0
      %697 = vmatpush1.msra.mxu0 0.0
      %698 = vmatprep.subr.mxu0 0.0
      %699 = vmatpush1.msra.mxu0 0.0
      %700 = vmatprep.subr.mxu0 0.0
      %701 = vmatpush1.msra.mxu0 0.0
      %702 = vmatprep.subr.mxu0 0.0
      %703 = vmatpush1.msra.mxu0 0.0
      %704 = vmatprep.subr.mxu0 0.0
      %705 = vmatpush1.msra.mxu0 0.0
      %706 = vmatprep.subr.mxu0 0.0
      %707 = vmatpush1.msra.mxu0 0.0
      %708 = vmatprep.subr.mxu0 0.0
      %709 = vmatpush1.msra.mxu0 0.0
      %710 = vmatprep.subr.mxu0 0.0
      %711 = vmatpush1.msra.mxu0 %v148
      %712 = vmatprep.subr.mxu0 0.0
      %713 = vmatpush2.msra.mxu0 0.0
      %714 = vmatprep.subr.mxu0 0.0
      %715 = vmatpush2.msra.mxu0 0.0
      %716 = vmatprep.subr.mxu0 0.0
      %717 = vmatpush2.msra.mxu0 0.0
      %718 = vmatprep.subr.mxu0 0.0
      %719 = vmatpush2.msra.mxu0 0.0
      %720 = vmatprep.subr.mxu0 0.0
      %721 = vmatpush2.msra.mxu0 0.0
      %722 = vmatprep.subr.mxu0 0.0
      %723 = vmatpush2.msra.mxu0 0.0
      %724 = vmatprep.subr.mxu0 0.0
      %725 = vmatpush2.msra.mxu0 0.0
      %726 = vmatprep.subr.mxu0 0.0
      %727 = vmatpush2.msra.mxu0 0.0
      %728 = vmatprep.subr.mxu0 0.0
      %729 = vmatpush2.msra.mxu0 0.0
      %730 = vmatprep.subr.mxu0 0.0
      %731 = vmatpush2.msra.mxu0 0.0
      %732 = vmatprep.subr.mxu0 0.0
      %733 = vmatpush2.msra.mxu0 0.0
      %734 = vmatprep.subr.mxu0 0.0
      %735 = vmatpush2.msra.mxu0 0.0
      %736 = vmatprep.subr.mxu0 0.0
      %737 = vmatpush2.msra.mxu0 0.0
      %738 = vmatprep.subr.mxu0 0.0
      %739 = vmatpush2.msra.mxu0 0.0
      %740 = vmatprep.subr.mxu0 0.0
      %741 = vmatpush2.msra.mxu0 0.0
      %742 = vmatprep.subr.mxu0 0.0
      %743 = vmatpush2.msra.mxu0 0.0
      %744 = vmatprep.mubr.f32.mxu0 0.0
      %745 = vmatmul.mubr.f32.gmra.mxu0 %v678
      %v746 = vpop.f32.mrf.mxu0
      %v747 = vadd.f32 0.0, %v746
      %v748 = vpop.f32.mrf.mxu0
      %749 = vdwg.mxu0
      %v750 = vmul.f32 %v747, %v676
      %v752 = vsel %vm441, %v351, 0
      %754 = vmatprep.subr.mxu0 0.0
      %755 = vmatpush1.msra.mxu0 0.0
      %756 = vmatprep.subr.mxu0 0.0
      %757 = vmatpush1.msra.mxu0 0.0
      %758 = vmatprep.subr.mxu0 0.0
      %759 = vmatpush1.msra.mxu0 0.0
      %760 = vmatprep.subr.mxu0 0.0
      %761 = vmatpush1.msra.mxu0 0.0
      %762 = vmatprep.subr.mxu0 0.0
      %763 = vmatpush1.msra.mxu0 0.0
      %764 = vmatprep.subr.mxu0 0.0
      %765 = vmatpush1.msra.mxu0 0.0
      %766 = vmatprep.subr.mxu0 0.0
      %767 = vmatpush1.msra.mxu0 0.0
      %768 = vmatprep.subr.mxu0 0.0
      %769 = vmatpush1.msra.mxu0 0.0
      %770 = vmatprep.subr.mxu0 0.0
      %771 = vmatpush1.msra.mxu0 0.0
      %772 = vmatprep.subr.mxu0 0.0
      %773 = vmatpush1.msra.mxu0 0.0
      %774 = vmatprep.subr.mxu0 0.0
      %775 = vmatpush1.msra.mxu0 0.0
      %776 = vmatprep.subr.mxu0 0.0
      %777 = vmatpush1.msra.mxu0 0.0
      %778 = vmatprep.subr.mxu0 0.0
      %779 = vmatpush1.msra.mxu0 0.0
      %780 = vmatprep.subr.mxu0 0.0
      %781 = vmatpush1.msra.mxu0 0.0
      %782 = vmatprep.subr.mxu0 0.0
      %783 = vmatpush1.msra.mxu0 0.0
      %784 = vmatprep.subr.mxu0 0.0
      %785 = vmatpush1.msra.mxu0 %v148
      %786 = vmatprep.subr.mxu0 0.0
      %787 = vmatpush2.msra.mxu0 0.0
      %788 = vmatprep.subr.mxu0 0.0
      %789 = vmatpush2.msra.mxu0 0.0
      %790 = vmatprep.subr.mxu0 0.0
      %791 = vmatpush2.msra.mxu0 0.0
      %792 = vmatprep.subr.mxu0 0.0
      %793 = vmatpush2.msra.mxu0 0.0
      %794 = vmatprep.subr.mxu0 0.0
      %795 = vmatpush2.msra.mxu0 0.0
      %796 = vmatprep.subr.mxu0 0.0
      %797 = vmatpush2.msra.mxu0 0.0
      %798 = vmatprep.subr.mxu0 0.0
      %799 = vmatpush2.msra.mxu0 0.0
      %800 = vmatprep.subr.mxu0 0.0
      %801 = vmatpush2.msra.mxu0 0.0
      %802 = vmatprep.subr.mxu0 0.0
      %803 = vmatpush2.msra.mxu0 0.0
      %804 = vmatprep.subr.mxu0 0.0
      %805 = vmatpush2.msra.mxu0 0.0
      %806 = vmatprep.subr.mxu0 0.0
      %807 = vmatpush2.msra.mxu0 0.0
      %808 = vmatprep.subr.mxu0 0.0
      %809 = vmatpush2.msra.mxu0 0.0
      %810 = vmatprep.subr.mxu0 0.0
      %811 = vmatpush2.msra.mxu0 0.0
      %812 = vmatprep.subr.mxu0 0.0
      %813 = vmatpush2.msra.mxu0 0.0
      %814 = vmatprep.subr.mxu0 0.0
      %815 = vmatpush2.msra.mxu0 0.0
      %816 = vmatprep.subr.mxu0 0.0
      %817 = vmatpush2.msra.mxu0 0.0
      %818 = vmatprep.mubr.f32.mxu0 0.0
      %819 = vmatmul.mubr.f32.gmra.mxu0 %v752
      %v820 = vpop.f32.mrf.mxu0
      %v821 = vadd.f32 0.0, %v820
      %v822 = vpop.f32.mrf.mxu0
      %823 = vdwg.mxu0
      %v824 = vmul.f32 %v821, %v676
      %v826 = vsel %vm441, %v425, 0
      %828 = vmatprep.subr.mxu0 0.0
      %829 = vmatpush1.msra.mxu0 0.0
      %830 = vmatprep.subr.mxu0 0.0
      %831 = vmatpush1.msra.mxu0 0.0
      %832 = vmatprep.subr.mxu0 0.0
      %833 = vmatpush1.msra.mxu0 0.0
      %834 = vmatprep.subr.mxu0 0.0
      %835 = vmatpush1.msra.mxu0 0.0
      %836 = vmatprep.subr.mxu0 0.0
      %837 = vmatpush1.msra.mxu0 0.0
      %838 = vmatprep.subr.mxu0 0.0
      %839 = vmatpush1.msra.mxu0 0.0
      %840 = vmatprep.subr.mxu0 0.0
      %841 = vmatpush1.msra.mxu0 0.0
      %842 = vmatprep.subr.mxu0 0.0
      %843 = vmatpush1.msra.mxu0 0.0
      %844 = vmatprep.subr.mxu0 0.0
      %845 = vmatpush1.msra.mxu0 0.0
      %846 = vmatprep.subr.mxu0 0.0
      %847 = vmatpush1.msra.mxu0 0.0
      %848 = vmatprep.subr.mxu0 0.0
      %849 = vmatpush1.msra.mxu0 0.0
      %850 = vmatprep.subr.mxu0 0.0
      %851 = vmatpush1.msra.mxu0 0.0
      %852 = vmatprep.subr.mxu0 0.0
      %853 = vmatpush1.msra.mxu0 0.0
      %854 = vmatprep.subr.mxu0 0.0
      %855 = vmatpush1.msra.mxu0 0.0
      %856 = vmatprep.subr.mxu0 0.0
      %857 = vmatpush1.msra.mxu0 0.0
      %858 = vmatprep.subr.mxu0 0.0
      %859 = vmatpush1.msra.mxu0 %v148
      %860 = vmatprep.subr.mxu0 0.0
      %861 = vmatpush2.msra.mxu0 0.0
      %862 = vmatprep.subr.mxu0 0.0
      %863 = vmatpush2.msra.mxu0 0.0
      %864 = vmatprep.subr.mxu0 0.0
      %865 = vmatpush2.msra.mxu0 0.0
      %866 = vmatprep.subr.mxu0 0.0
      %867 = vmatpush2.msra.mxu0 0.0
      %868 = vmatprep.subr.mxu0 0.0
      %869 = vmatpush2.msra.mxu0 0.0
      %870 = vmatprep.subr.mxu0 0.0
      %871 = vmatpush2.msra.mxu0 0.0
      %872 = vmatprep.subr.mxu0 0.0
      %873 = vmatpush2.msra.mxu0 0.0
      %874 = vmatprep.subr.mxu0 0.0
      %875 = vmatpush2.msra.mxu0 0.0
      %876 = vmatprep.subr.mxu0 0.0
      %877 = vmatpush2.msra.mxu0 0.0
      %878 = vmatprep.subr.mxu0 0.0
      %879 = vmatpush2.msra.mxu0 0.0
      %880 = vmatprep.subr.mxu0 0.0
      %881 = vmatpush2.msra.mxu0 0.0
      %882 = vmatprep.subr.mxu0 0.0
      %883 = vmatpush2.msra.mxu0 0.0
      %884 = vmatprep.subr.mxu0 0.0
      %885 = vmatpush2.msra.mxu0 0.0
      %886 = vmatprep.subr.mxu0 0.0
      %887 = vmatpush2.msra.mxu0 0.0
      %888 = vmatprep.subr.mxu0 0.0
      %889 = vmatpush2.msra.mxu0 0.0
      %890 = vmatprep.subr.mxu0 0.0
      %891 = vmatpush2.msra.mxu0 0.0
      %892 = vmatprep.mubr.f32.mxu0 0.0
      %893 = vmatmul.mubr.f32.gmra.mxu0 %v826
      %v894 = vpop.f32.mrf.mxu0
      %v895 = vadd.f32 0.0, %v894
      %v896 = vpop.f32.mrf.mxu0
      %897 = vdwg.mxu0
      %v898 = vmul.f32 %v895, %v676
      %899 = vst.msk [vmem:[%s138] sm:$0xff] %vm597, %v592
      %901 = vrot.lane.b32.xlu0 %v750, 32
      %v902 = vpop.permute.xlu0 %901
      %vm904 = vcmask 326912
      %905 = vst.msk [vmem:[%s138] sm:$0xff] %vm904, %v902
      %907 = vrot.lane.b32.xlu0 %v824, 40
      %v908 = vpop.permute.xlu0 %907
      %vm910 = vcmask 392512
      %911 = vst.msk [vmem:[%s138] sm:$0xff] %vm910, %v908
      %913 = vrot.lane.b32.xlu0 %v898, 48
      %v914 = vpop.permute.xlu0 %913
      %vm916 = vcmask 458112
      %917 = vst.msk [vmem:[%s138] sm:$0xff] %vm916, %v914
      %vm918 = vcmask 1048000
      %919 = vst.msk [vmem:[%s138] sm:$0xff] %vm918, 0.0
      %p920 = scmp.lt.s32.totalorder %s13, 1
      %s921 = scalar_select %p920, %s13, 1
      %s922 = smul.addr %s921, 8
      %s923 = scalar_lea.vmem %s2, %s922
      // Predicated region
      $region29: #{gcp_embedding_forward.2} parent=27 // pred_check
        %p924 = pneg %p78
      $region30: #{gcp_embedding_forward.2} parent=27 // pred_check_branch
        %926 = sbr.rel (%p924) target = $region32
      $region31: #{gcp_embedding_forward.2} parent=27 // pred_region
        _
      $region32: #{gcp_embedding_forward.2} parent=27 // pred_fallthru
        _
    $region28: #{gcp_embedding_forward.2} parent=5 // pred_fallthru
      _
    %p927 = scmp.le.s32.totalorder 2, %s8
    // Predicated region
    $region33: #{gcp_embedding_forward.2} parent=5 // pred_check
      %p928 = pneg %p927
    $region34: #{gcp_embedding_forward.2} parent=5 // pred_check_branch
      %930 = sbr.rel (%p928) target = $region36
    $region35: #{gcp_embedding_forward.2} parent=5 // pred_region
      %s931 = ssub.s32 %s8, 2
      // Predicated region
      $region37: #{gcp_embedding_forward.2} parent=35 // pred_check
        %p932 = pneg %p84
      $region38: #{gcp_embedding_forward.2} parent=35 // pred_check_branch
        %934 = sbr.rel (%p932) target = $region40
      $region39: #{gcp_embedding_forward.2} parent=35 // pred_region
        %p935 = scmp.lt.s32.totalorder %s14, 1
        %s936 = scalar_select %p935, %s14, 1
        %s937 = smul.addr %s936, 8
        %s938 = scalar_lea.vmem %s2, %s937
      $region40: #{gcp_embedding_forward.2} parent=35 // pred_fallthru
        _
    $region36: #{gcp_embedding_forward.2} parent=5 // pred_fallthru
      _
  $region6: #{gcp_embedding_forward.2} parent=0 // loop_footer
    %s12 = sadd.s32 1, %s8
  $region7: #{gcp_embedding_forward.2} parent=0 // loop_footer_branch
    %7 = sbr.rel target = $region3
  $region8: #{gcp_embedding_forward.2} parent=0 // loop_exit
    _

</llo_original>
